<compile_context>
chip_gen: v7x
topology: tpu7x:2x2x1
jax: 0.10.0
libtpu: 0.0.40
codegen_flags: <defaults>
</compile_context>

<pallas_src>
import jax
import jax.numpy as jnp
from jax.experimental import pallas as pl
from jax.experimental.pallas import tpu as pltpu


def _round_up(a, m):
    return (a + m - 1) // m * m


def _pad_gatewise(w, H, Hp, axis=0):
    """Pad a tensor whose `axis` holds 3 concatenated gates of size H so each
    gate becomes size Hp (zeros appended per gate)."""
    if H == Hp:
        return w
    parts = []
    for g in range(3):
        sl = [slice(None)] * w.ndim
        sl[axis] = slice(g * H, (g + 1) * H)
        wg = w[tuple(sl)]
        pad = [(0, 0)] * w.ndim
        pad[axis] = (0, Hp - H)
        parts.append(jnp.pad(wg, pad))
    return jnp.concatenate(parts, axis=axis)


# ----------------------------------------------------------------------------
# Fused kernel: per-chunk input-gate matmul + serial GRU recurrence.
# Grid = (batch_tiles, time_chunks); semantics ("parallel", "arbitrary").
# ----------------------------------------------------------------------------
def gru_fused_kernel(x_ref, h0_ref, wih_ref, whh_ref, b_ref, bhhn_ref,
                     out_ref, gi_scratch, h_scratch):
    s = pl.program_id(1)
    T, BT, I = x_ref.shape
    Hp = h_scratch.shape[-1]

    # Initialize the carried hidden state at the first time chunk of each
    # batch tile (time axis iterates fastest / is the "arbitrary" axis).
    @pl.when(s == 0)
    def _():
        h_scratch[...] = h0_ref[0].astype(jnp.float32)

    # --- Fused input-gate matmul for the whole chunk (one big MXU op). ---
    # b_ref already holds b_ih + b_hh[r,z]; only b_hh_n stays in the loop
    # (it must sit inside the r* multiply).
    x2 = x_ref[...].reshape(T * BT, I)
    gi2 = (jnp.dot(x2, wih_ref[...], preferred_element_type=jnp.float32)
           + b_ref[...])
    gi_scratch[...] = gi2.reshape(T, BT, 3 * Hp)

    # Hoist resident weights / bias out of the time loop.
    whh = whh_ref[...]                      # (Hp, 3Hp), native dtype
    b_hh_n = bhhn_ref[...]                  # (1, Hp), f32
    mm_dtype = whh.dtype

    def step(tt, h_prev):
        gi = gi_scratch[tt]                 # (BT, 3Hp) f32, lane-aligned slices
        gh = jnp.dot(h_prev.astype(mm_dtype), whh,
                     preferred_element_type=jnp.float32)   # (BT, 3Hp) f32
        r = jax.nn.sigmoid(gi[:, 0:Hp] + gh[:, 0:Hp])
        z = jax.nn.sigmoid(gi[:, Hp:2 * Hp] + gh[:, Hp:2 * Hp])
        n = jnp.tanh(gi[:, 2 * Hp:] + r * (gh[:, 2 * Hp:] + b_hh_n))
        h_new = (1.0 - z) * n + z * h_prev
        out_ref[tt] = h_new.astype(out_ref.dtype)           # lane-dense store
        return h_new

    h_final = jax.lax.fori_loop(0, T, step, h_scratch[...],
                                unroll=min(T, 8))
    h_scratch[...] = h_final


def dag_gru_forward(x, h0, w_ih, w_hh, b_ih, b_hh):
    """x: (S, B, I), h0: (1, B, H).
    w_ih: (3H, I), w_hh: (3H, H), b_ih/b_hh: (3H,)  -- PyTorch GRU shapes."""
    S, B, I = x.shape
    H = h0.shape[-1]
    dtype = x.dtype

    # ---- TPU-friendly padding ----
    Hp = _round_up(H, 128)             # lane-aligned gates + dense stores
    B8 = _round_up(B, 8)               # sublane alignment
    BT = min(B8, 128)                  # batch tile (parallel grid axis)
    B_pad = _round_up(B8, BT)
    T = S if S <= 32 else 32           # fixed chunk size (no gcd cliff)
    S_pad = _round_up(S, T)

    # ---- parameter prep (native weight dtype; f32 biases) ----
    w_ih = jnp.asarray(w_ih)
    w_hh = jnp.asarray(w_hh)
    b_ih32 = jnp.asarray(b_ih, jnp.float32)
    b_hh32 = jnp.asarray(b_hh, jnp.float32)
    # Fold b_ih plus the r/z parts of b_hh into the hoisted gi matmul.
    b_merged = b_ih32 + jnp.concatenate(
        [b_hh32[:2 * H], jnp.zeros((H,), jnp.float32)])

    wih_p = _pad_gatewise(w_ih, H, Hp, axis=0)               # (3Hp, I)
    whh_p = _pad_gatewise(w_hh, H, Hp, axis=0)               # (3Hp, H)
    whh_p = jnp.pad(whh_p, ((0, 0), (0, Hp - H)))            # (3Hp, Hp)
    b_merged_p = _pad_gatewise(b_merged, H, Hp).reshape(1, 3 * Hp)
    b_hh_n_p = jnp.pad(b_hh32[2 * H:], (0, Hp - H)).reshape(1, Hp)

    # Transpose so the kernel does (rows, I) x (I, 3Hp) and (BT, Hp) x (Hp, 3Hp).
    # TODO(synk): optionally cast x/weights to bf16 for the MXU on v6e/v7x.
    wih_T = wih_p.T                                          # (I, 3Hp)
    whh_T = whh_p.T                                          # (Hp, 3Hp)

    x_p = jnp.pad(x, ((0, S_pad - S), (0, B_pad - B), (0, 0)))
    h0_p = jnp.pad(h0, ((0, 0), (0, B_pad - B), (0, Hp - H)))

    nb = B_pad // BT
    ns = S_pad // T

    # ---- explicit VMEM budget (double-buffered blocks + scratches) ----
    isz = jnp.dtype(dtype).itemsize
    wsz = jnp.dtype(w_ih.dtype).itemsize
    blocks = (
        2 * T * BT * I * isz                          # x chunk
        + 2 * T * BT * Hp * isz                       # out chunk
        + 2 * BT * Hp * isz                           # h0
        + 2 * (I * 3 * Hp + Hp * 3 * Hp) * wsz        # weights
        + 2 * (3 * Hp + Hp) * 4                       # biases
        + T * BT * 3 * Hp * 4 + BT * Hp * 4           # gi / h scratches
    )
    vmem_limit = int(min(64 << 20, max(32 << 20, 2 * blocks)))

    out_p = pl.pallas_call(
        gru_fused_kernel,
        out_shape=jax.ShapeDtypeStruct((S_pad, B_pad, Hp), dtype),
        grid_spec=pltpu.PrefetchScalarGridSpec(
            num_scalar_prefetch=0,
            grid=(nb, ns),
            in_specs=[
                pl.BlockSpec((T, BT, I), lambda b, s: (s, b, 0)),     # x chunk
                pl.BlockSpec((1, BT, Hp), lambda b, s: (0, b, 0)),    # h0 tile
                pl.BlockSpec((I, 3 * Hp), lambda b, s: (0, 0)),       # W_ih^T
                pl.BlockSpec((Hp, 3 * Hp), lambda b, s: (0, 0)),      # W_hh^T
                pl.BlockSpec((1, 3 * Hp), lambda b, s: (0, 0)),       # merged bias
                pl.BlockSpec((1, Hp), lambda b, s: (0, 0)),           # b_hh_n
            ],
            out_specs=pl.BlockSpec((T, BT, Hp), lambda b, s: (s, b, 0)),
            scratch_shapes=[
                pltpu.VMEM((T, BT, 3 * Hp), jnp.float32),             # gi chunk
                pltpu.VMEM((BT, Hp), jnp.float32),                    # carried h
            ],
        ),
        compiler_params=pltpu.CompilerParams(
            dimension_semantics=("parallel", "arbitrary"),
            vmem_limit_bytes=vmem_limit),
    )(x_p, h0_p, wih_T, whh_T, b_merged_p, b_hh_n_p)

    out = out_p[:S, :B, :H]
    hn = out[S - 1:S]          # h at the last *real* timestep (padding-safe)
    return out, hn


def gru_reference(x, h0, w_ih, w_hh, b_ih, b_hh):
    """Pure-JAX reference matching torch.nn.GRU (1 layer, time-major)."""
    H = h0.shape[-1]

    def step(h, x_t):
        gi = x_t @ w_ih.T + b_ih
        gh = h @ w_hh.T + b_hh
        i_r, i_z, i_n = gi[:, :H], gi[:, H:2 * H], gi[:, 2 * H:]
        h_r, h_z, h_n = gh[:, :H], gh[:, H:2 * H], gh[:, 2 * H:]
        r = jax.nn.sigmoid(i_r + h_r)
        z = jax.nn.sigmoid(i_z + h_z)
        n = jnp.tanh(i_n + r * h_n)
        h_new = (1.0 - z) * n + z * h
        return h_new, h_new

    hT, ys = jax.lax.scan(step, h0[0], x)
    return ys, hT[None]


if __name__ == "__main__":
    S, B, I, H = 8, 4, 16, 32  # seq_len, batch, input_size, hidden_size
    key = jax.random.PRNGKey(0)
    k_x, k_h, k1, k2, k3, k4 = jax.random.split(key, 6)

    x = jax.random.normal(k_x, (S, B, I), dtype=jnp.float32)
    h0 = jax.random.normal(k_h, (1, B, H), dtype=jnp.float32)

    # PyTorch-style init: U(-1/sqrt(H), 1/sqrt(H)), shapes as in nn.GRU
    bound = 1.0 / jnp.sqrt(jnp.float32(H))
    w_ih = jax.random.uniform(k1, (3 * H, I), jnp.float32, -bound, bound)
    w_hh = jax.random.uniform(k2, (3 * H, H), jnp.float32, -bound, bound)
    b_ih = jax.random.uniform(k3, (3 * H,), jnp.float32, -bound, bound)
    b_hh = jax.random.uniform(k4, (3 * H,), jnp.float32, -bound, bound)

    out, hn = dag_gru_forward(x, h0, w_ih, w_hh, b_ih, b_hh)
    jax.block_until_ready((out, hn))

    out_ref, hn_ref = gru_reference(x, h0, w_ih, w_hh, b_ih, b_hh)
    assert out.shape == (S, B, H) and hn.shape == (1, B, H)
    assert jnp.allclose(out, out_ref, atol=1e-5, rtol=1e-5)
    assert jnp.allclose(hn, hn_ref, atol=1e-5, rtol=1e-5)

    print("KERNEL_OK")
</pallas_src>

<mosaic_0001>
module attributes {stable_mosaic.version = 11 : i64} {
  func.func @gru_fused_kernel(%arg0: i32, %arg1: i32, %arg2: memref<8x8x16xf32, #tpu.memory_space<vmem>>, %arg3: memref<1x8x128xf32, #tpu.memory_space<vmem>>, %arg4: memref<16x384xf32, #tpu.memory_space<vmem>>, %arg5: memref<128x384xf32, #tpu.memory_space<vmem>>, %arg6: memref<1x384xf32, #tpu.memory_space<vmem>>, %arg7: memref<1x128xf32, #tpu.memory_space<vmem>>, %arg8: memref<8x8x128xf32, #tpu.memory_space<vmem>>, %arg9: memref<8x8x384xf32, #tpu.memory_space<vmem>>, %arg10: memref<8x128xf32, #tpu.memory_space<vmem>>) attributes {dimension_semantics = [#tpu.dimension_semantics<parallel>, #tpu.dimension_semantics<arbitrary>], iteration_bounds = array<i64: 1, 1>, scalar_prefetch = 0 : i64, scratch_operands = 2 : i64, tpu.core_type = #tpu.core_type<tc>, window_params = [{transform_indices = @transform_0, window_bounds = array<i64: 8, 8, 16>}, {transform_indices = @transform_1, window_bounds = array<i64: 1, 8, 128>}, {pipeline_mode = #tpu.pipeline_mode<synchronous>, transform_indices = @transform_2, window_bounds = array<i64: 16, 384>}, {pipeline_mode = #tpu.pipeline_mode<synchronous>, transform_indices = @transform_3, window_bounds = array<i64: 128, 384>}, {pipeline_mode = #tpu.pipeline_mode<synchronous>, transform_indices = @transform_4, window_bounds = array<i64: 1, 384>}, {pipeline_mode = #tpu.pipeline_mode<synchronous>, transform_indices = @transform_5, window_bounds = array<i64: 1, 128>}, {transform_indices = @transform_6, window_bounds = array<i64: 8, 8, 128>}]} {
    %c0_i32 = arith.constant 0 : i32
    %0 = arith.cmpi eq, %arg1, %c0_i32 : i32
    %1 = arith.extui %0 : i1 to i32
    %c0_i32_0 = arith.constant 0 : i32
    %2 = arith.cmpi ne, %1, %c0_i32_0 : i32
    scf.if %2 {
      %c0_83 = arith.constant 0 : index
      %c0_84 = arith.constant 0 : index
      %c0_85 = arith.constant 0 : index
      %304 = vector.load %arg3[%c0_83, %c0_84, %c0_85] : memref<1x8x128xf32, #tpu.memory_space<vmem>>, vector<1x8x128xf32>
      %305 = vector.shape_cast %304 : vector<1x8x128xf32> to vector<8x128xf32>
      %c0_86 = arith.constant 0 : index
      %c0_87 = arith.constant 0 : index
      %306 = vector.load %arg10[%c0_86, %c0_87] : memref<8x128xf32, #tpu.memory_space<vmem>>, vector<8x128xf32>
      tpu.vector_store %arg10[%c0_86, %c0_87], %305 {strides = array<i32>} : memref<8x128xf32, #tpu.memory_space<vmem>>, vector<8x128xf32>,
    } else {
    }
    %c0 = arith.constant 0 : index
    %c0_1 = arith.constant 0 : index
    %c0_2 = arith.constant 0 : index
    %3 = vector.load %arg2[%c0, %c0_1, %c0_2] : memref<8x8x16xf32, #tpu.memory_space<vmem>>, vector<8x8x16xf32>
    %4 = vector.shape_cast %3 : vector<8x8x16xf32> to vector<64x16xf32>
    %c0_3 = arith.constant 0 : index
    %c0_4 = arith.constant 0 : index
    %5 = vector.load %arg4[%c0_3, %c0_4] : memref<16x384xf32, #tpu.memory_space<vmem>>, vector<16x384xf32>
    %cst = arith.constant dense<0.000000e+00> : vector<64x384xf32>
    %6 = tpu.matmul %4, %5, %cst {dimension_numbers = #tpu.dot_dimension_numbers<[1], [0], [0], [1], [0, 0, 1, 1], [], []>} : vector<64x16xf32>, vector<16x384xf32>, vector<64x384xf32> -> vector<64x384xf32>
    %c0_5 = arith.constant 0 : index
    %c0_6 = arith.constant 0 : index
    %7 = vector.load %arg6[%c0_5, %c0_6] : memref<1x384xf32, #tpu.memory_space<vmem>>, vector<1x384xf32>
    %8 = vector.broadcast %7 : vector<1x384xf32> to vector<64x384xf32>
    %9 = arith.addf %6, %8 : vector<64x384xf32>
    %10 = vector.shape_cast %9 : vector<64x384xf32> to vector<8x8x384xf32>
    %c0_7 = arith.constant 0 : index
    %c0_8 = arith.constant 0 : index
    %c0_9 = arith.constant 0 : index
    %11 = vector.load %arg9[%c0_7, %c0_8, %c0_9] : memref<8x8x384xf32, #tpu.memory_space<vmem>>, vector<8x8x384xf32>
    tpu.vector_store %arg9[%c0_7, %c0_8, %c0_9], %10 {strides = array<i32>} : memref<8x8x384xf32, #tpu.memory_space<vmem>>, vector<8x8x384xf32>,
    %c0_10 = arith.constant 0 : index
    %c0_11 = arith.constant 0 : index
    %12 = vector.load %arg5[%c0_10, %c0_11] : memref<128x384xf32, #tpu.memory_space<vmem>>, vector<128x384xf32>
    %c0_12 = arith.constant 0 : index
    %c0_13 = arith.constant 0 : index
    %13 = vector.load %arg7[%c0_12, %c0_13] : memref<1x128xf32, #tpu.memory_space<vmem>>, vector<1x128xf32>
    %c0_14 = arith.constant 0 : index
    %c0_15 = arith.constant 0 : index
    %14 = vector.load %arg10[%c0_14, %c0_15] : memref<8x128xf32, #tpu.memory_space<vmem>>, vector<8x128xf32>
    %c0_i32_16 = arith.constant 0 : i32
    %15 = arith.index_cast %c0_i32_16 : i32 to index
    %c0_17 = arith.constant 0 : index
    %c0_18 = arith.constant 0 : index
    %16 = vector.load %arg9[%15, %c0_17, %c0_18] : memref<8x8x384xf32, #tpu.memory_space<vmem>>, vector<1x8x384xf32>
    %17 = vector.shape_cast %16 : vector<1x8x384xf32> to vector<8x384xf32>
    %cst_19 = arith.constant dense<0.000000e+00> : vector<8x384xf32>
    %18 = tpu.matmul %14, %12, %cst_19 {dimension_numbers = #tpu.dot_dimension_numbers<[1], [0], [0], [1], [0, 0, 1, 1], [], []>} : vector<8x128xf32>, vector<128x384xf32>, vector<8x384xf32> -> vector<8x384xf32>
    %19 = vector.extract_strided_slice %17 {offsets = [0, 0], sizes = [8, 128], strides = [1, 1]} : vector<8x384xf32> to vector<8x128xf32>
    %20 = vector.extract_strided_slice %18 {offsets = [0, 0], sizes = [8, 128], strides = [1, 1]} : vector<8x384xf32> to vector<8x128xf32>
    %21 = arith.addf %19, %20 : vector<8x128xf32>
    %22 = arith.negf %21 : vector<8x128xf32>
    %23 = math.exp %22 : vector<8x128xf32>
    %cst_20 = arith.constant 1.000000e+00 : f32
    %24 = vector.broadcast %cst_20 : f32 to vector<8x128xf32>
    %25 = arith.addf %24, %23 : vector<8x128xf32>
    %26 = arith.divf %24, %25 : vector<8x128xf32>
    %27 = vector.extract_strided_slice %17 {offsets = [0, 128], sizes = [8, 128], strides = [1, 1]} : vector<8x384xf32> to vector<8x128xf32>
    %28 = vector.extract_strided_slice %18 {offsets = [0, 128], sizes = [8, 128], strides = [1, 1]} : vector<8x384xf32> to vector<8x128xf32>
    %29 = arith.addf %27, %28 : vector<8x128xf32>
    %30 = arith.negf %29 : vector<8x128xf32>
    %31 = math.exp %30 : vector<8x128xf32>
    %cst_21 = arith.constant 1.000000e+00 : f32
    %32 = vector.broadcast %cst_21 : f32 to vector<8x128xf32>
    %33 = arith.addf %32, %31 : vector<8x128xf32>
    %34 = arith.divf %32, %33 : vector<8x128xf32>
    %35 = vector.extract_strided_slice %17 {offsets = [0, 256], sizes = [8, 128], strides = [1, 1]} : vector<8x384xf32> to vector<8x128xf32>
    %36 = vector.extract_strided_slice %18 {offsets = [0, 256], sizes = [8, 128], strides = [1, 1]} : vector<8x384xf32> to vector<8x128xf32>
    %37 = vector.broadcast %13 : vector<1x128xf32> to vector<8x128xf32>
    %38 = arith.addf %36, %37 : vector<8x128xf32>
    %39 = arith.mulf %26, %38 : vector<8x128xf32>
    %40 = arith.addf %35, %39 : vector<8x128xf32>
    %41 = math.tanh %40 : vector<8x128xf32>
    %cst_22 = arith.constant 1.000000e+00 : f32
    %42 = vector.broadcast %cst_22 : f32 to vector<8x128xf32>
    %43 = arith.subf %42, %34 : vector<8x128xf32>
    %44 = arith.mulf %43, %41 : vector<8x128xf32>
    %45 = arith.mulf %34, %14 : vector<8x128xf32>
    %46 = arith.addf %44, %45 : vector<8x128xf32>
    %47 = arith.index_cast %c0_i32_16 : i32 to index
    %c0_23 = arith.constant 0 : index
    %c0_24 = arith.constant 0 : index
    %48 = vector.load %arg8[%47, %c0_23, %c0_24] : memref<8x8x128xf32, #tpu.memory_space<vmem>>, vector<1x8x128xf32>
    %49 = vector.shape_cast %48 : vector<1x8x128xf32> to vector<8x128xf32>
    %50 = vector.shape_cast %46 : vector<8x128xf32> to vector<1x8x128xf32>
    tpu.vector_store %arg8[%47, %c0_23, %c0_24], %50 {strides = array<i32>} : memref<8x8x128xf32, #tpu.memory_space<vmem>>, vector<1x8x128xf32>,
    %c1_i32 = arith.constant 1 : i32
    %51 = arith.index_cast %c1_i32 : i32 to index
    %c0_25 = arith.constant 0 : index
    %c0_26 = arith.constant 0 : index
    %52 = vector.load %arg9[%51, %c0_25, %c0_26] : memref<8x8x384xf32, #tpu.memory_space<vmem>>, vector<1x8x384xf32>
    %53 = vector.shape_cast %52 : vector<1x8x384xf32> to vector<8x384xf32>
    %cst_27 = arith.constant dense<0.000000e+00> : vector<8x384xf32>
    %54 = tpu.matmul %46, %12, %cst_27 {dimension_numbers = #tpu.dot_dimension_numbers<[1], [0], [0], [1], [0, 0, 1, 1], [], []>} : vector<8x128xf32>, vector<128x384xf32>, vector<8x384xf32> -> vector<8x384xf32>
    %55 = vector.extract_strided_slice %53 {offsets = [0, 0], sizes = [8, 128], strides = [1, 1]} : vector<8x384xf32> to vector<8x128xf32>
    %56 = vector.extract_strided_slice %54 {offsets = [0, 0], sizes = [8, 128], strides = [1, 1]} : vector<8x384xf32> to vector<8x128xf32>
    %57 = arith.addf %55, %56 : vector<8x128xf32>
    %58 = arith.negf %57 : vector<8x128xf32>
    %59 = math.exp %58 : vector<8x128xf32>
    %cst_28 = arith.constant 1.000000e+00 : f32
    %60 = vector.broadcast %cst_28 : f32 to vector<8x128xf32>
    %61 = arith.addf %60, %59 : vector<8x128xf32>
    %62 = arith.divf %60, %61 : vector<8x128xf32>
    %63 = vector.extract_strided_slice %53 {offsets = [0, 128], sizes = [8, 128], strides = [1, 1]} : vector<8x384xf32> to vector<8x128xf32>
    %64 = vector.extract_strided_slice %54 {offsets = [0, 128], sizes = [8, 128], strides = [1, 1]} : vector<8x384xf32> to vector<8x128xf32>
    %65 = arith.addf %63, %64 : vector<8x128xf32>
    %66 = arith.negf %65 : vector<8x128xf32>
    %67 = math.exp %66 : vector<8x128xf32>
    %cst_29 = arith.constant 1.000000e+00 : f32
    %68 = vector.broadcast %cst_29 : f32 to vector<8x128xf32>
    %69 = arith.addf %68, %67 : vector<8x128xf32>
    %70 = arith.divf %68, %69 : vector<8x128xf32>
    %71 = vector.extract_strided_slice %53 {offsets = [0, 256], sizes = [8, 128], strides = [1, 1]} : vector<8x384xf32> to vector<8x128xf32>
    %72 = vector.extract_strided_slice %54 {offsets = [0, 256], sizes = [8, 128], strides = [1, 1]} : vector<8x384xf32> to vector<8x128xf32>
    %73 = vector.broadcast %13 : vector<1x128xf32> to vector<8x128xf32>
    %74 = arith.addf %72, %73 : vector<8x128xf32>
    %75 = arith.mulf %62, %74 : vector<8x128xf32>
    %76 = arith.addf %71, %75 : vector<8x128xf32>
    %77 = math.tanh %76 : vector<8x128xf32>
    %cst_30 = arith.constant 1.000000e+00 : f32
    %78 = vector.broadcast %cst_30 : f32 to vector<8x128xf32>
    %79 = arith.subf %78, %70 : vector<8x128xf32>
    %80 = arith.mulf %79, %77 : vector<8x128xf32>
    %81 = arith.mulf %70, %46 : vector<8x128xf32>
    %82 = arith.addf %80, %81 : vector<8x128xf32>
    %83 = arith.index_cast %c1_i32 : i32 to index
    %c0_31 = arith.constant 0 : index
    %c0_32 = arith.constant 0 : index
    %84 = vector.load %arg8[%83, %c0_31, %c0_32] : memref<8x8x128xf32, #tpu.memory_space<vmem>>, vector<1x8x128xf32>
    %85 = vector.shape_cast %84 : vector<1x8x128xf32> to vector<8x128xf32>
    %86 = vector.shape_cast %82 : vector<8x128xf32> to vector<1x8x128xf32>
    tpu.vector_store %arg8[%83, %c0_31, %c0_32], %86 {strides = array<i32>} : memref<8x8x128xf32, #tpu.memory_space<vmem>>, vector<1x8x128xf32>,
    %c2_i32 = arith.constant 2 : i32
    %87 = arith.index_cast %c2_i32 : i32 to index
    %c0_33 = arith.constant 0 : index
    %c0_34 = arith.constant 0 : index
    %88 = vector.load %arg9[%87, %c0_33, %c0_34] : memref<8x8x384xf32, #tpu.memory_space<vmem>>, vector<1x8x384xf32>
    %89 = vector.shape_cast %88 : vector<1x8x384xf32> to vector<8x384xf32>
    %cst_35 = arith.constant dense<0.000000e+00> : vector<8x384xf32>
    %90 = tpu.matmul %82, %12, %cst_35 {dimension_numbers = #tpu.dot_dimension_numbers<[1], [0], [0], [1], [0, 0, 1, 1], [], []>} : vector<8x128xf32>, vector<128x384xf32>, vector<8x384xf32> -> vector<8x384xf32>
    %91 = vector.extract_strided_slice %89 {offsets = [0, 0], sizes = [8, 128], strides = [1, 1]} : vector<8x384xf32> to vector<8x128xf32>
    %92 = vector.extract_strided_slice %90 {offsets = [0, 0], sizes = [8, 128], strides = [1, 1]} : vector<8x384xf32> to vector<8x128xf32>
    %93 = arith.addf %91, %92 : vector<8x128xf32>
    %94 = arith.negf %93 : vector<8x128xf32>
    %95 = math.exp %94 : vector<8x128xf32>
    %cst_36 = arith.constant 1.000000e+00 : f32
    %96 = vector.broadcast %cst_36 : f32 to vector<8x128xf32>
    %97 = arith.addf %96, %95 : vector<8x128xf32>
    %98 = arith.divf %96, %97 : vector<8x128xf32>
    %99 = vector.extract_strided_slice %89 {offsets = [0, 128], sizes = [8, 128], strides = [1, 1]} : vector<8x384xf32> to vector<8x128xf32>
    %100 = vector.extract_strided_slice %90 {offsets = [0, 128], sizes = [8, 128], strides = [1, 1]} : vector<8x384xf32> to vector<8x128xf32>
    %101 = arith.addf %99, %100 : vector<8x128xf32>
    %102 = arith.negf %101 : vector<8x128xf32>
    %103 = math.exp %102 : vector<8x128xf32>
    %cst_37 = arith.constant 1.000000e+00 : f32
    %104 = vector.broadcast %cst_37 : f32 to vector<8x128xf32>
    %105 = arith.addf %104, %103 : vector<8x128xf32>
    %106 = arith.divf %104, %105 : vector<8x128xf32>
    %107 = vector.extract_strided_slice %89 {offsets = [0, 256], sizes = [8, 128], strides = [1, 1]} : vector<8x384xf32> to vector<8x128xf32>
    %108 = vector.extract_strided_slice %90 {offsets = [0, 256], sizes = [8, 128], strides = [1, 1]} : vector<8x384xf32> to vector<8x128xf32>
    %109 = vector.broadcast %13 : vector<1x128xf32> to vector<8x128xf32>
    %110 = arith.addf %108, %109 : vector<8x128xf32>
    %111 = arith.mulf %98, %110 : vector<8x128xf32>
    %112 = arith.addf %107, %111 : vector<8x128xf32>
    %113 = math.tanh %112 : vector<8x128xf32>
    %cst_38 = arith.constant 1.000000e+00 : f32
    %114 = vector.broadcast %cst_38 : f32 to vector<8x128xf32>
    %115 = arith.subf %114, %106 : vector<8x128xf32>
    %116 = arith.mulf %115, %113 : vector<8x128xf32>
    %117 = arith.mulf %106, %82 : vector<8x128xf32>
    %118 = arith.addf %116, %117 : vector<8x128xf32>
    %119 = arith.index_cast %c2_i32 : i32 to index
    %c0_39 = arith.constant 0 : index
    %c0_40 = arith.constant 0 : index
    %120 = vector.load %arg8[%119, %c0_39, %c0_40] : memref<8x8x128xf32, #tpu.memory_space<vmem>>, vector<1x8x128xf32>
    %121 = vector.shape_cast %120 : vector<1x8x128xf32> to vector<8x128xf32>
    %122 = vector.shape_cast %118 : vector<8x128xf32> to vector<1x8x128xf32>
    tpu.vector_store %arg8[%119, %c0_39, %c0_40], %122 {strides = array<i32>} : memref<8x8x128xf32, #tpu.memory_space<vmem>>, vector<1x8x128xf32>,
    %c3_i32 = arith.constant 3 : i32
    %123 = arith.index_cast %c3_i32 : i32 to index
    %c0_41 = arith.constant 0 : index
    %c0_42 = arith.constant 0 : index
    %124 = vector.load %arg9[%123, %c0_41, %c0_42] : memref<8x8x384xf32, #tpu.memory_space<vmem>>, vector<1x8x384xf32>
    %125 = vector.shape_cast %124 : vector<1x8x384xf32> to vector<8x384xf32>
    %cst_43 = arith.constant dense<0.000000e+00> : vector<8x384xf32>
    %126 = tpu.matmul %118, %12, %cst_43 {dimension_numbers = #tpu.dot_dimension_numbers<[1], [0], [0], [1], [0, 0, 1, 1], [], []>} : vector<8x128xf32>, vector<128x384xf32>, vector<8x384xf32> -> vector<8x384xf32>
    %127 = vector.extract_strided_slice %125 {offsets = [0, 0], sizes = [8, 128], strides = [1, 1]} : vector<8x384xf32> to vector<8x128xf32>
    %128 = vector.extract_strided_slice %126 {offsets = [0, 0], sizes = [8, 128], strides = [1, 1]} : vector<8x384xf32> to vector<8x128xf32>
    %129 = arith.addf %127, %128 : vector<8x128xf32>
    %130 = arith.negf %129 : vector<8x128xf32>
    %131 = math.exp %130 : vector<8x128xf32>
    %cst_44 = arith.constant 1.000000e+00 : f32
    %132 = vector.broadcast %cst_44 : f32 to vector<8x128xf32>
    %133 = arith.addf %132, %131 : vector<8x128xf32>
    %134 = arith.divf %132, %133 : vector<8x128xf32>
    %135 = vector.extract_strided_slice %125 {offsets = [0, 128], sizes = [8, 128], strides = [1, 1]} : vector<8x384xf32> to vector<8x128xf32>
    %136 = vector.extract_strided_slice %126 {offsets = [0, 128], sizes = [8, 128], strides = [1, 1]} : vector<8x384xf32> to vector<8x128xf32>
    %137 = arith.addf %135, %136 : vector<8x128xf32>
    %138 = arith.negf %137 : vector<8x128xf32>
    %139 = math.exp %138 : vector<8x128xf32>
    %cst_45 = arith.constant 1.000000e+00 : f32
    %140 = vector.broadcast %cst_45 : f32 to vector<8x128xf32>
    %141 = arith.addf %140, %139 : vector<8x128xf32>
    %142 = arith.divf %140, %141 : vector<8x128xf32>
    %143 = vector.extract_strided_slice %125 {offsets = [0, 256], sizes = [8, 128], strides = [1, 1]} : vector<8x384xf32> to vector<8x128xf32>
    %144 = vector.extract_strided_slice %126 {offsets = [0, 256], sizes = [8, 128], strides = [1, 1]} : vector<8x384xf32> to vector<8x128xf32>
    %145 = vector.broadcast %13 : vector<1x128xf32> to vector<8x128xf32>
    %146 = arith.addf %144, %145 : vector<8x128xf32>
    %147 = arith.mulf %134, %146 : vector<8x128xf32>
    %148 = arith.addf %143, %147 : vector<8x128xf32>
    %149 = math.tanh %148 : vector<8x128xf32>
    %cst_46 = arith.constant 1.000000e+00 : f32
    %150 = vector.broadcast %cst_46 : f32 to vector<8x128xf32>
    %151 = arith.subf %150, %142 : vector<8x128xf32>
    %152 = arith.mulf %151, %149 : vector<8x128xf32>
    %153 = arith.mulf %142, %118 : vector<8x128xf32>
    %154 = arith.addf %152, %153 : vector<8x128xf32>
    %155 = arith.index_cast %c3_i32 : i32 to index
    %c0_47 = arith.constant 0 : index
    %c0_48 = arith.constant 0 : index
    %156 = vector.load %arg8[%155, %c0_47, %c0_48] : memref<8x8x128xf32, #tpu.memory_space<vmem>>, vector<1x8x128xf32>
    %157 = vector.shape_cast %156 : vector<1x8x128xf32> to vector<8x128xf32>
    %158 = vector.shape_cast %154 : vector<8x128xf32> to vector<1x8x128xf32>
    tpu.vector_store %arg8[%155, %c0_47, %c0_48], %158 {strides = array<i32>} : memref<8x8x128xf32, #tpu.memory_space<vmem>>, vector<1x8x128xf32>,
    %c4_i32 = arith.constant 4 : i32
    %159 = arith.index_cast %c4_i32 : i32 to index
    %c0_49 = arith.constant 0 : index
    %c0_50 = arith.constant 0 : index
    %160 = vector.load %arg9[%159, %c0_49, %c0_50] : memref<8x8x384xf32, #tpu.memory_space<vmem>>, vector<1x8x384xf32>
    %161 = vector.shape_cast %160 : vector<1x8x384xf32> to vector<8x384xf32>
    %cst_51 = arith.constant dense<0.000000e+00> : vector<8x384xf32>
    %162 = tpu.matmul %154, %12, %cst_51 {dimension_numbers = #tpu.dot_dimension_numbers<[1], [0], [0], [1], [0, 0, 1, 1], [], []>} : vector<8x128xf32>, vector<128x384xf32>, vector<8x384xf32> -> vector<8x384xf32>
    %163 = vector.extract_strided_slice %161 {offsets = [0, 0], sizes = [8, 128], strides = [1, 1]} : vector<8x384xf32> to vector<8x128xf32>
    %164 = vector.extract_strided_slice %162 {offsets = [0, 0], sizes = [8, 128], strides = [1, 1]} : vector<8x384xf32> to vector<8x128xf32>
    %165 = arith.addf %163, %164 : vector<8x128xf32>
    %166 = arith.negf %165 : vector<8x128xf32>
    %167 = math.exp %166 : vector<8x128xf32>
    %cst_52 = arith.constant 1.000000e+00 : f32
    %168 = vector.broadcast %cst_52 : f32 to vector<8x128xf32>
    %169 = arith.addf %168, %167 : vector<8x128xf32>
    %170 = arith.divf %168, %169 : vector<8x128xf32>
    %171 = vector.extract_strided_slice %161 {offsets = [0, 128], sizes = [8, 128], strides = [1, 1]} : vector<8x384xf32> to vector<8x128xf32>
    %172 = vector.extract_strided_slice %162 {offsets = [0, 128], sizes = [8, 128], strides = [1, 1]} : vector<8x384xf32> to vector<8x128xf32>
    %173 = arith.addf %171, %172 : vector<8x128xf32>
    %174 = arith.negf %173 : vector<8x128xf32>
    %175 = math.exp %174 : vector<8x128xf32>
    %cst_53 = arith.constant 1.000000e+00 : f32
    %176 = vector.broadcast %cst_53 : f32 to vector<8x128xf32>
    %177 = arith.addf %176, %175 : vector<8x128xf32>
    %178 = arith.divf %176, %177 : vector<8x128xf32>
    %179 = vector.extract_strided_slice %161 {offsets = [0, 256], sizes = [8, 128], strides = [1, 1]} : vector<8x384xf32> to vector<8x128xf32>
    %180 = vector.extract_strided_slice %162 {offsets = [0, 256], sizes = [8, 128], strides = [1, 1]} : vector<8x384xf32> to vector<8x128xf32>
    %181 = vector.broadcast %13 : vector<1x128xf32> to vector<8x128xf32>
    %182 = arith.addf %180, %181 : vector<8x128xf32>
    %183 = arith.mulf %170, %182 : vector<8x128xf32>
    %184 = arith.addf %179, %183 : vector<8x128xf32>
    %185 = math.tanh %184 : vector<8x128xf32>
    %cst_54 = arith.constant 1.000000e+00 : f32
    %186 = vector.broadcast %cst_54 : f32 to vector<8x128xf32>
    %187 = arith.subf %186, %178 : vector<8x128xf32>
    %188 = arith.mulf %187, %185 : vector<8x128xf32>
    %189 = arith.mulf %178, %154 : vector<8x128xf32>
    %190 = arith.addf %188, %189 : vector<8x128xf32>
    %191 = arith.index_cast %c4_i32 : i32 to index
    %c0_55 = arith.constant 0 : index
    %c0_56 = arith.constant 0 : index
    %192 = vector.load %arg8[%191, %c0_55, %c0_56] : memref<8x8x128xf32, #tpu.memory_space<vmem>>, vector<1x8x128xf32>
    %193 = vector.shape_cast %192 : vector<1x8x128xf32> to vector<8x128xf32>
    %194 = vector.shape_cast %190 : vector<8x128xf32> to vector<1x8x128xf32>
    tpu.vector_store %arg8[%191, %c0_55, %c0_56], %194 {strides = array<i32>} : memref<8x8x128xf32, #tpu.memory_space<vmem>>, vector<1x8x128xf32>,
    %c5_i32 = arith.constant 5 : i32
    %195 = arith.index_cast %c5_i32 : i32 to index
    %c0_57 = arith.constant 0 : index
    %c0_58 = arith.constant 0 : index
    %196 = vector.load %arg9[%195, %c0_57, %c0_58] : memref<8x8x384xf32, #tpu.memory_space<vmem>>, vector<1x8x384xf32>
    %197 = vector.shape_cast %196 : vector<1x8x384xf32> to vector<8x384xf32>
    %cst_59 = arith.constant dense<0.000000e+00> : vector<8x384xf32>
    %198 = tpu.matmul %190, %12, %cst_59 {dimension_numbers = #tpu.dot_dimension_numbers<[1], [0], [0], [1], [0, 0, 1, 1], [], []>} : vector<8x128xf32>, vector<128x384xf32>, vector<8x384xf32> -> vector<8x384xf32>
    %199 = vector.extract_strided_slice %197 {offsets = [0, 0], sizes = [8, 128], strides = [1, 1]} : vector<8x384xf32> to vector<8x128xf32>
    %200 = vector.extract_strided_slice %198 {offsets = [0, 0], sizes = [8, 128], strides = [1, 1]} : vector<8x384xf32> to vector<8x128xf32>
    %201 = arith.addf %199, %200 : vector<8x128xf32>
    %202 = arith.negf %201 : vector<8x128xf32>
    %203 = math.exp %202 : vector<8x128xf32>
    %cst_60 = arith.constant 1.000000e+00 : f32
    %204 = vector.broadcast %cst_60 : f32 to vector<8x128xf32>
    %205 = arith.addf %204, %203 : vector<8x128xf32>
    %206 = arith.divf %204, %205 : vector<8x128xf32>
    %207 = vector.extract_strided_slice %197 {offsets = [0, 128], sizes = [8, 128], strides = [1, 1]} : vector<8x384xf32> to vector<8x128xf32>
    %208 = vector.extract_strided_slice %198 {offsets = [0, 128], sizes = [8, 128], strides = [1, 1]} : vector<8x384xf32> to vector<8x128xf32>
    %209 = arith.addf %207, %208 : vector<8x128xf32>
    %210 = arith.negf %209 : vector<8x128xf32>
    %211 = math.exp %210 : vector<8x128xf32>
    %cst_61 = arith.constant 1.000000e+00 : f32
    %212 = vector.broadcast %cst_61 : f32 to vector<8x128xf32>
    %213 = arith.addf %212, %211 : vector<8x128xf32>
    %214 = arith.divf %212, %213 : vector<8x128xf32>
    %215 = vector.extract_strided_slice %197 {offsets = [0, 256], sizes = [8, 128], strides = [1, 1]} : vector<8x384xf32> to vector<8x128xf32>
    %216 = vector.extract_strided_slice %198 {offsets = [0, 256], sizes = [8, 128], strides = [1, 1]} : vector<8x384xf32> to vector<8x128xf32>
    %217 = vector.broadcast %13 : vector<1x128xf32> to vector<8x128xf32>
    %218 = arith.addf %216, %217 : vector<8x128xf32>
    %219 = arith.mulf %206, %218 : vector<8x128xf32>
    %220 = arith.addf %215, %219 : vector<8x128xf32>
    %221 = math.tanh %220 : vector<8x128xf32>
    %cst_62 = arith.constant 1.000000e+00 : f32
    %222 = vector.broadcast %cst_62 : f32 to vector<8x128xf32>
    %223 = arith.subf %222, %214 : vector<8x128xf32>
    %224 = arith.mulf %223, %221 : vector<8x128xf32>
    %225 = arith.mulf %214, %190 : vector<8x128xf32>
    %226 = arith.addf %224, %225 : vector<8x128xf32>
    %227 = arith.index_cast %c5_i32 : i32 to index
    %c0_63 = arith.constant 0 : index
    %c0_64 = arith.constant 0 : index
    %228 = vector.load %arg8[%227, %c0_63, %c0_64] : memref<8x8x128xf32, #tpu.memory_space<vmem>>, vector<1x8x128xf32>
    %229 = vector.shape_cast %228 : vector<1x8x128xf32> to vector<8x128xf32>
    %230 = vector.shape_cast %226 : vector<8x128xf32> to vector<1x8x128xf32>
    tpu.vector_store %arg8[%227, %c0_63, %c0_64], %230 {strides = array<i32>} : memref<8x8x128xf32, #tpu.memory_space<vmem>>, vector<1x8x128xf32>,
    %c6_i32 = arith.constant 6 : i32
    %231 = arith.index_cast %c6_i32 : i32 to index
    %c0_65 = arith.constant 0 : index
    %c0_66 = arith.constant 0 : index
    %232 = vector.load %arg9[%231, %c0_65, %c0_66] : memref<8x8x384xf32, #tpu.memory_space<vmem>>, vector<1x8x384xf32>
    %233 = vector.shape_cast %232 : vector<1x8x384xf32> to vector<8x384xf32>
    %cst_67 = arith.constant dense<0.000000e+00> : vector<8x384xf32>
    %234 = tpu.matmul %226, %12, %cst_67 {dimension_numbers = #tpu.dot_dimension_numbers<[1], [0], [0], [1], [0, 0, 1, 1], [], []>} : vector<8x128xf32>, vector<128x384xf32>, vector<8x384xf32> -> vector<8x384xf32>
    %235 = vector.extract_strided_slice %233 {offsets = [0, 0], sizes = [8, 128], strides = [1, 1]} : vector<8x384xf32> to vector<8x128xf32>
    %236 = vector.extract_strided_slice %234 {offsets = [0, 0], sizes = [8, 128], strides = [1, 1]} : vector<8x384xf32> to vector<8x128xf32>
    %237 = arith.addf %235, %236 : vector<8x128xf32>
    %238 = arith.negf %237 : vector<8x128xf32>
    %239 = math.exp %238 : vector<8x128xf32>
    %cst_68 = arith.constant 1.000000e+00 : f32
    %240 = vector.broadcast %cst_68 : f32 to vector<8x128xf32>
    %241 = arith.addf %240, %239 : vector<8x128xf32>
    %242 = arith.divf %240, %241 : vector<8x128xf32>
    %243 = vector.extract_strided_slice %233 {offsets = [0, 128], sizes = [8, 128], strides = [1, 1]} : vector<8x384xf32> to vector<8x128xf32>
    %244 = vector.extract_strided_slice %234 {offsets = [0, 128], sizes = [8, 128], strides = [1, 1]} : vector<8x384xf32> to vector<8x128xf32>
    %245 = arith.addf %243, %244 : vector<8x128xf32>
    %246 = arith.negf %245 : vector<8x128xf32>
    %247 = math.exp %246 : vector<8x128xf32>
    %cst_69 = arith.constant 1.000000e+00 : f32
    %248 = vector.broadcast %cst_69 : f32 to vector<8x128xf32>
    %249 = arith.addf %248, %247 : vector<8x128xf32>
    %250 = arith.divf %248, %249 : vector<8x128xf32>
    %251 = vector.extract_strided_slice %233 {offsets = [0, 256], sizes = [8, 128], strides = [1, 1]} : vector<8x384xf32> to vector<8x128xf32>
    %252 = vector.extract_strided_slice %234 {offsets = [0, 256], sizes = [8, 128], strides = [1, 1]} : vector<8x384xf32> to vector<8x128xf32>
    %253 = vector.broadcast %13 : vector<1x128xf32> to vector<8x128xf32>
    %254 = arith.addf %252, %253 : vector<8x128xf32>
    %255 = arith.mulf %242, %254 : vector<8x128xf32>
    %256 = arith.addf %251, %255 : vector<8x128xf32>
    %257 = math.tanh %256 : vector<8x128xf32>
    %cst_70 = arith.constant 1.000000e+00 : f32
    %258 = vector.broadcast %cst_70 : f32 to vector<8x128xf32>
    %259 = arith.subf %258, %250 : vector<8x128xf32>
    %260 = arith.mulf %259, %257 : vector<8x128xf32>
    %261 = arith.mulf %250, %226 : vector<8x128xf32>
    %262 = arith.addf %260, %261 : vector<8x128xf32>
    %263 = arith.index_cast %c6_i32 : i32 to index
    %c0_71 = arith.constant 0 : index
    %c0_72 = arith.constant 0 : index
    %264 = vector.load %arg8[%263, %c0_71, %c0_72] : memref<8x8x128xf32, #tpu.memory_space<vmem>>, vector<1x8x128xf32>
    %265 = vector.shape_cast %264 : vector<1x8x128xf32> to vector<8x128xf32>
    %266 = vector.shape_cast %262 : vector<8x128xf32> to vector<1x8x128xf32>
    tpu.vector_store %arg8[%263, %c0_71, %c0_72], %266 {strides = array<i32>} : memref<8x8x128xf32, #tpu.memory_space<vmem>>, vector<1x8x128xf32>,
    %c7_i32 = arith.constant 7 : i32
    %267 = arith.index_cast %c7_i32 : i32 to index
    %c0_73 = arith.constant 0 : index
    %c0_74 = arith.constant 0 : index
    %268 = vector.load %arg9[%267, %c0_73, %c0_74] : memref<8x8x384xf32, #tpu.memory_space<vmem>>, vector<1x8x384xf32>
    %269 = vector.shape_cast %268 : vector<1x8x384xf32> to vector<8x384xf32>
    %cst_75 = arith.constant dense<0.000000e+00> : vector<8x384xf32>
    %270 = tpu.matmul %262, %12, %cst_75 {dimension_numbers = #tpu.dot_dimension_numbers<[1], [0], [0], [1], [0, 0, 1, 1], [], []>} : vector<8x128xf32>, vector<128x384xf32>, vector<8x384xf32> -> vector<8x384xf32>
    %271 = vector.extract_strided_slice %269 {offsets = [0, 0], sizes = [8, 128], strides = [1, 1]} : vector<8x384xf32> to vector<8x128xf32>
    %272 = vector.extract_strided_slice %270 {offsets = [0, 0], sizes = [8, 128], strides = [1, 1]} : vector<8x384xf32> to vector<8x128xf32>
    %273 = arith.addf %271, %272 : vector<8x128xf32>
    %274 = arith.negf %273 : vector<8x128xf32>
    %275 = math.exp %274 : vector<8x128xf32>
    %cst_76 = arith.constant 1.000000e+00 : f32
    %276 = vector.broadcast %cst_76 : f32 to vector<8x128xf32>
    %277 = arith.addf %276, %275 : vector<8x128xf32>
    %278 = arith.divf %276, %277 : vector<8x128xf32>
    %279 = vector.extract_strided_slice %269 {offsets = [0, 128], sizes = [8, 128], strides = [1, 1]} : vector<8x384xf32> to vector<8x128xf32>
    %280 = vector.extract_strided_slice %270 {offsets = [0, 128], sizes = [8, 128], strides = [1, 1]} : vector<8x384xf32> to vector<8x128xf32>
    %281 = arith.addf %279, %280 : vector<8x128xf32>
    %282 = arith.negf %281 : vector<8x128xf32>
    %283 = math.exp %282 : vector<8x128xf32>
    %cst_77 = arith.constant 1.000000e+00 : f32
    %284 = vector.broadcast %cst_77 : f32 to vector<8x128xf32>
    %285 = arith.addf %284, %283 : vector<8x128xf32>
    %286 = arith.divf %284, %285 : vector<8x128xf32>
    %287 = vector.extract_strided_slice %269 {offsets = [0, 256], sizes = [8, 128], strides = [1, 1]} : vector<8x384xf32> to vector<8x128xf32>
    %288 = vector.extract_strided_slice %270 {offsets = [0, 256], sizes = [8, 128], strides = [1, 1]} : vector<8x384xf32> to vector<8x128xf32>
    %289 = vector.broadcast %13 : vector<1x128xf32> to vector<8x128xf32>
    %290 = arith.addf %288, %289 : vector<8x128xf32>
    %291 = arith.mulf %278, %290 : vector<8x128xf32>
    %292 = arith.addf %287, %291 : vector<8x128xf32>
    %293 = math.tanh %292 : vector<8x128xf32>
    %cst_78 = arith.constant 1.000000e+00 : f32
    %294 = vector.broadcast %cst_78 : f32 to vector<8x128xf32>
    %295 = arith.subf %294, %286 : vector<8x128xf32>
    %296 = arith.mulf %295, %293 : vector<8x128xf32>
    %297 = arith.mulf %286, %262 : vector<8x128xf32>
    %298 = arith.addf %296, %297 : vector<8x128xf32>
    %299 = arith.index_cast %c7_i32 : i32 to index
    %c0_79 = arith.constant 0 : index
    %c0_80 = arith.constant 0 : index
    %300 = vector.load %arg8[%299, %c0_79, %c0_80] : memref<8x8x128xf32, #tpu.memory_space<vmem>>, vector<1x8x128xf32>
    %301 = vector.shape_cast %300 : vector<1x8x128xf32> to vector<8x128xf32>
    %302 = vector.shape_cast %298 : vector<8x128xf32> to vector<1x8x128xf32>
    tpu.vector_store %arg8[%299, %c0_79, %c0_80], %302 {strides = array<i32>} : memref<8x8x128xf32, #tpu.memory_space<vmem>>, vector<1x8x128xf32>,
    %c8_i32 = arith.constant 8 : i32
    %c0_81 = arith.constant 0 : index
    %c0_82 = arith.constant 0 : index
    %303 = vector.load %arg10[%c0_81, %c0_82] : memref<8x128xf32, #tpu.memory_space<vmem>>, vector<8x128xf32>
    tpu.vector_store %arg10[%c0_81, %c0_82], %298 {strides = array<i32>} : memref<8x128xf32, #tpu.memory_space<vmem>>, vector<8x128xf32>,
    return
  }
  func.func @transform_0(%arg0: i32, %arg1: i32) -> (i32, i32, i32) {
    %c0_i32 = arith.constant 0 : i32
    %c0_i32_0 = arith.constant 0 : i32
    return %arg1, %arg0, %c0_i32 : i32, i32, i32
  }
  func.func @transform_1(%arg0: i32, %arg1: i32) -> (i32, i32, i32) {
    %c0_i32 = arith.constant 0 : i32
    %c0_i32_0 = arith.constant 0 : i32
    %c0_i32_1 = arith.constant 0 : i32
    return %c0_i32, %arg0, %c0_i32_0 : i32, i32, i32
  }
  func.func @transform_2(%arg0: i32, %arg1: i32) -> (i32, i32) {
    %c0_i32 = arith.constant 0 : i32
    %c0_i32_0 = arith.constant 0 : i32
    %c0_i32_1 = arith.constant 0 : i32
    return %c0_i32, %c0_i32_0 : i32, i32
  }
  func.func @transform_3(%arg0: i32, %arg1: i32) -> (i32, i32) {
    %c0_i32 = arith.constant 0 : i32
    %c0_i32_0 = arith.constant 0 : i32
    %c0_i32_1 = arith.constant 0 : i32
    return %c0_i32, %c0_i32_0 : i32, i32
  }
  func.func @transform_4(%arg0: i32, %arg1: i32) -> (i32, i32) {
    %c0_i32 = arith.constant 0 : i32
    %c0_i32_0 = arith.constant 0 : i32
    %c0_i32_1 = arith.constant 0 : i32
    return %c0_i32, %c0_i32_0 : i32, i32
  }
  func.func @transform_5(%arg0: i32, %arg1: i32) -> (i32, i32) {
    %c0_i32 = arith.constant 0 : i32
    %c0_i32_0 = arith.constant 0 : i32
    %c0_i32_1 = arith.constant 0 : i32
    return %c0_i32, %c0_i32_0 : i32, i32
  }
  func.func @transform_6(%arg0: i32, %arg1: i32) -> (i32, i32, i32) {
    %c0_i32 = arith.constant 0 : i32
    %c0_i32_0 = arith.constant 0 : i32
    return %arg1, %arg0, %c0_i32 : i32, i32, i32
  }
}

</mosaic_0001>

<llo_original>
// kernel: tpu_custom_call.1
$region0: #{tpu_custom_call.1}
  #allocation0 [shape = 'u32[]', space=smem, size = 0x4, offset = 0x4, fixed_abs, tag = 'smem constant byte address 0x4 - core index']
  #allocation1 [shape = 'u32[144,128]{1,0:T(1,128)}', space=vmem, size = 0x12000, scoped, tag = 'internal scratch']
  #allocation2 [shape = 'f32[8,8,384]{2,1,0:T(8,128)}', space=vmem, size = 0x18000, scoped, tag = 'scratch operand']
  #allocation3 [shape = 'f32[8,128]{1,0:T(8,128)}', space=vmem, size = 0x1000, scoped, tag = 'scratch operand']
  %s0 = inlined_call_operand.hbm [shape: f32[8,8,16], index: 0, kind: input, shape index: {}]
  %s1 = inlined_call_operand.hbm [shape: f32[1,8,128], index: 1, kind: input, shape index: {}]
  %s2 = inlined_call_operand.hbm [shape: f32[16,384], index: 2, kind: input, shape index: {}]
  %s3 = inlined_call_operand.hbm [shape: f32[128,384], index: 3, kind: input, shape index: {}]
  %s4 = inlined_call_operand.vmem [shape: f32[1,384], index: 4, kind: input, shape index: {}]
  %s5 = inlined_call_operand.vmem [shape: f32[1,128], index: 5, kind: input, shape index: {}]
  %s6 = inlined_call_operand.hbm [shape: f32[8,8,128], index: 6, kind: output, shape index: {}]
  %s7 = sld [smem:[#allocation0]]
  $region54: #{tpu_custom_call.1} parent=0
    _
  %s9 = ssub.s32 1, %s7
  %s10 = scalar_select 0, %s9, %s7
  $region1: #{tpu_custom_call.1} parent=0
    #allocation4 [shape = 'u8[32768]{0}', space=vmem, size = 0x8000, scoped, tag = 'input window, operand 0, single buffered']
    #allocation5 [shape = 's32[1]{0}', space=sflag, size = 0x4, scoped, tag = 'scoped memory for tpu_custom_call.1']
    #allocation6 [shape = 's32[1]{0}', space=sflag, size = 0x4, scoped, tag = 'scoped memory for tpu_custom_call.1']
    #allocation7 [shape = 'u8[4096]{0}', space=vmem, size = 0x1000, scoped, tag = 'input window, operand 1, single buffered']
    #allocation8 [shape = 's32[1]{0}', space=sflag, size = 0x4, scoped, tag = 'scoped memory for tpu_custom_call.1']
    #allocation9 [shape = 'u8[24576]{0}', space=vmem, size = 0x6000, scoped, tag = 'input window, operand 2, single buffered']
    #allocation10 [shape = 'u8[196608]{0}', space=vmem, size = 0x30000, scoped, tag = 'input window, operand 3, single buffered']
    #allocation11 [shape = 's32[1]{0}', space=sflag, size = 0x4, scoped, tag = 'scoped memory for tpu_custom_call.1']
    #allocation12 [shape = 'u8[32768]{0}', space=vmem, size = 0x8000, scoped, tag = 'output window, operand 0, single buffered']
    %11 = vsyncpa [#allocation5], 0
    %12 = vsyncpa [#allocation8], 0
    %13 = vsyncpa [#allocation11], 0
    %14 = vsyncpa [#allocation6], 0
    // Predicated region
    $region2: #{tpu_custom_call.1} parent=1 // pred_check
      _
    $region3: #{tpu_custom_call.1} parent=1 // pred_check_branch
      %16 = sbr.rel (0) target = $region5
    $region4: #{tpu_custom_call.1} parent=1 // pred_region
      %s18 = ssub.s32 1024, 1024
      %19 = vsyncadd [#allocation5], %s18
      %s20 = sshll.u32 [#allocation4], 4
      %s21 = int_to_ptr.vmem [resolvable:$true] %s20
      %26 = dma.hbm_to_vmem [thread:$0]  %s0, 1024, %s21, [#allocation5], 128, 128, 8
    $region5: #{tpu_custom_call.1} parent=1 // pred_fallthru
      _
    // Predicated region
    $region6: #{tpu_custom_call.1} parent=1 // pred_check
      _
    $region7: #{tpu_custom_call.1} parent=1 // pred_check_branch
      %28 = sbr.rel (0) target = $region9
    $region8: #{tpu_custom_call.1} parent=1 // pred_region
      %s30 = ssub.s32 128, 128
      %31 = vsyncadd [#allocation8], %s30
      %s33 = sshll.u32 [#allocation7], 4
      %s34 = int_to_ptr.vmem [resolvable:$true] %s33
      %36 = dma.hbm_to_vmem [thread:$0]  %s1, 128, %s34, [#allocation8]
    $region9: #{tpu_custom_call.1} parent=1 // pred_fallthru
      _
    // Predicated region
    $region10: #{tpu_custom_call.1} parent=1 // pred_check
      _
    $region11: #{tpu_custom_call.1} parent=1 // pred_check_branch
      %38 = sbr.rel (0) target = $region13
    $region12: #{tpu_custom_call.1} parent=1 // pred_region
      %s40 = ssub.s32 768, 768
      %41 = vsyncadd [#allocation8], %s40
      %s42 = sshll.u32 [#allocation9], 4
      %s43 = int_to_ptr.vmem [resolvable:$true] %s42
      %48 = dma.hbm_to_vmem [thread:$0]  %s2, 768, %s43, [#allocation8], 384, 384, 24
    $region13: #{tpu_custom_call.1} parent=1 // pred_fallthru
      _
    // Predicated region
    $region14: #{tpu_custom_call.1} parent=1 // pred_check
      _
    $region15: #{tpu_custom_call.1} parent=1 // pred_check_branch
      %50 = sbr.rel (0) target = $region17
    $region16: #{tpu_custom_call.1} parent=1 // pred_region
      %s52 = ssub.s32 6144, 6144
      %53 = vsyncadd [#allocation11], %s52
      %s54 = sshll.u32 [#allocation10], 4
      %s55 = int_to_ptr.vmem [resolvable:$true] %s54
      %60 = dma.hbm_to_vmem [thread:$0]  %s3, 6144, %s55, [#allocation11], 384, 384, 24
    $region17: #{tpu_custom_call.1} parent=1 // pred_fallthru
      _
    // Predicated region
    $region18: #{tpu_custom_call.1} parent=1 // pred_check
      _
    $region19: #{tpu_custom_call.1} parent=1 // pred_check_branch
      %62 = sbr.rel (0) target = $region21
    $region20: #{tpu_custom_call.1} parent=1 // pred_region
      _
    $region21: #{tpu_custom_call.1} parent=1 // pred_fallthru
      _
    // Predicated region
    $region22: #{tpu_custom_call.1} parent=1 // pred_check
      _
    $region23: #{tpu_custom_call.1} parent=1 // pred_check_branch
      %64 = sbr.rel (0) target = $region25
    $region24: #{tpu_custom_call.1} parent=1 // pred_region
      _
    $region25: #{tpu_custom_call.1} parent=1 // pred_fallthru
      _
    // Predicated region
    $region26: #{tpu_custom_call.1} parent=1 // pred_check
      _
    $region27: #{tpu_custom_call.1} parent=1 // pred_check_branch
      %66 = sbr.rel (0) target = $region29
    $region28: #{tpu_custom_call.1} parent=1 // pred_region
      %67 = dma.done [#allocation5], 1024
    $region29: #{tpu_custom_call.1} parent=1 // pred_fallthru
      _
    // Predicated region
    $region30: #{tpu_custom_call.1} parent=1 // pred_check
      _
    $region31: #{tpu_custom_call.1} parent=1 // pred_check_branch
      %69 = sbr.rel (0) target = $region33
    $region32: #{tpu_custom_call.1} parent=1 // pred_region
      %70 = dma.done [#allocation8], 128
    $region33: #{tpu_custom_call.1} parent=1 // pred_fallthru
      _
    // Predicated region
    $region34: #{tpu_custom_call.1} parent=1 // pred_check
      _
    $region35: #{tpu_custom_call.1} parent=1 // pred_check_branch
      %72 = sbr.rel (0) target = $region37
    $region36: #{tpu_custom_call.1} parent=1 // pred_region
      %73 = dma.done [#allocation8], 768
    $region37: #{tpu_custom_call.1} parent=1 // pred_fallthru
      _
    // Predicated region
    $region38: #{tpu_custom_call.1} parent=1 // pred_check
      _
    $region39: #{tpu_custom_call.1} parent=1 // pred_check_branch
      %75 = sbr.rel (0) target = $region41
    $region40: #{tpu_custom_call.1} parent=1 // pred_region
      %76 = dma.done [#allocation11], 6144
    $region41: #{tpu_custom_call.1} parent=1 // pred_fallthru
      _
    %p77 = scmp.eq.s32.totalorder 0, 0
    // Predicated region
    $region42: #{tpu_custom_call.1} parent=1 // pred_check
      %p78 = pneg %p77
    $region43: #{tpu_custom_call.1} parent=1 // pred_check_branch
      %80 = sbr.rel (%p78) target = $region45
    $region44: #{tpu_custom_call.1} parent=1 // pred_region
      %v81 = vld [vmem:[#allocation7] sm:$0xff]
      %82 = vst [vmem:[#allocation3] sm:$0xff] %v81
    $region45: #{tpu_custom_call.1} parent=1 // pred_fallthru
      _
    %v83 = vld [vmem:[#allocation4] sm:$0xff]
    %v84 = vld [vmem:[#allocation4 + $0x8] sm:$0xff]
    %v85 = vld [vmem:[#allocation4 + $0x10] sm:$0xff]
    %v86 = vld [vmem:[#allocation4 + $0x18] sm:$0xff]
    %v87 = vld [vmem:[#allocation4 + $0x20] sm:$0xff]
    %v88 = vld [vmem:[#allocation4 + $0x28] sm:$0xff]
    %v89 = vld [vmem:[#allocation4 + $0x30] sm:$0xff]
    %v90 = vld [vmem:[#allocation4 + $0x38] sm:$0xff]
    %v91 = vld [vmem:[#allocation9] sm:$0xff]
    %v92 = vld [vmem:[#allocation9 + $0x8] sm:$0xff]
    %v93 = vld [vmem:[#allocation9 + $0x10] sm:$0xff]
    %v94 = vld [vmem:[#allocation9 + $0x18] sm:$0xff]
    %v95 = vld [vmem:[#allocation9 + $0x20] sm:$0xff]
    %v96 = vld [vmem:[#allocation9 + $0x28] sm:$0xff]
    %v97 = vld [vmem:[%s4] sm:$0x7]
    %v99 = vlaneseq
    %v100 = vshrl.u32 %v99, 7
    %v101 = vsub.s32 0, %v100
    %v102 = vrot.slane %v97, %v101
    %v103 = vlaneseq
    %v104 = vshrl.u32 %v103, 7
    %v105 = vsub.s32 1, %v104
    %v106 = vrot.slane %v97, %v105
    %v107 = vlaneseq
    %v108 = vshrl.u32 %v107, 7
    %v109 = vsub.s32 2, %v108
    %v110 = vrot.slane %v97, %v109
    %vm114 = vcmask 130048
    %v116 = vsel %vm114, %v83, 0
    %v119 = vsel %vm114, %v84, 0
    %v122 = vsel %vm114, %v85, 0
    %v125 = vsel %vm114, %v86, 0
    %v128 = vsel %vm114, %v87, 0
    %v131 = vsel %vm114, %v88, 0
    %v134 = vsel %vm114, %v89, 0
    %v137 = vsel %vm114, %v90, 0
    %139 = vmatprep.subr.mxu0 %v92
    %140 = vmatpush1.msra.mxu0 %v91
    %141 = vmatprep.subr.mxu0 %v95
    %142 = vmatpush1.msra.mxu0 %v94
    %143 = vmatprep.subr.mxu0 0.0
    %144 = vmatpush1.msra.mxu0 0.0
    %145 = vmatprep.subr.mxu0 0.0
    %146 = vmatpush1.msra.mxu0 0.0
    %147 = vmatprep.subr.mxu0 0.0
    %148 = vmatpush1.msra.mxu0 0.0
    %149 = vmatprep.subr.mxu0 0.0
    %150 = vmatpush1.msra.mxu0 0.0
    %151 = vmatprep.subr.mxu0 0.0
    %152 = vmatpush1.msra.mxu0 0.0
    %153 = vmatprep.subr.mxu0 0.0
    %154 = vmatpush1.msra.mxu0 0.0
    %155 = vmatprep.subr.mxu0 0.0
    %156 = vmatpush1.msra.mxu0 0.0
    %157 = vmatprep.subr.mxu0 0.0
    %158 = vmatpush1.msra.mxu0 0.0
    %159 = vmatprep.subr.mxu0 0.0
    %160 = vmatpush1.msra.mxu0 0.0
    %161 = vmatprep.subr.mxu0 0.0
    %162 = vmatpush1.msra.mxu0 0.0
    %163 = vmatprep.subr.mxu0 0.0
    %164 = vmatpush1.msra.mxu0 0.0
    %165 = vmatprep.subr.mxu0 0.0
    %166 = vmatpush1.msra.mxu0 0.0
    %167 = vmatprep.subr.mxu0 0.0
    %168 = vmatpush1.msra.mxu0 0.0
    %169 = vmatprep.subr.mxu0 0.0
    %170 = vmatpush1.msra.mxu0 0.0
    %171 = vmatprep.subr.mxu0 0.0
    %172 = vmatpush1.msra.mxu0 0.0
    %173 = vmatprep.subr.mxu0 0.0
    %174 = vmatpush1.msra.mxu0 0.0
    %175 = vmatprep.subr.mxu0 0.0
    %176 = vmatpush1.msra.mxu0 0.0
    %177 = vmatprep.subr.mxu0 0.0
    %178 = vmatpush1.msra.mxu0 0.0
    %179 = vmatprep.subr.mxu0 0.0
    %180 = vmatpush1.msra.mxu0 0.0
    %181 = vmatprep.subr.mxu0 0.0
    %182 = vmatpush1.msra.mxu0 0.0
    %183 = vmatprep.subr.mxu0 0.0
    %184 = vmatpush1.msra.mxu0 0.0
    %185 = vmatprep.subr.mxu0 0.0
    %186 = vmatpush1.msra.mxu0 0.0
    %187 = vmatprep.subr.mxu0 0.0
    %188 = vmatpush1.msra.mxu0 0.0
    %189 = vmatprep.subr.mxu0 0.0
    %190 = vmatpush1.msra.mxu0 0.0
    %191 = vmatprep.subr.mxu0 0.0
    %192 = vmatpush1.msra.mxu0 0.0
    %193 = vmatprep.subr.mxu0 0.0
    %194 = vmatpush1.msra.mxu0 0.0
    %195 = vmatprep.subr.mxu0 0.0
    %196 = vmatpush1.msra.mxu0 0.0
    %197 = vmatprep.subr.mxu0 0.0
    %198 = vmatpush1.msra.mxu0 0.0
    %199 = vmatprep.subr.mxu0 0.0
    %200 = vmatpush1.msra.mxu0 0.0
    %201 = vmatprep.subr.mxu0 0.0
    %202 = vmatpush1.msra.mxu0 0.0
    %203 = vmatprep.mubr.f32.mxu0 0.0
    %204 = vmatmul.mubr.f32.gmra.mrb[0].mxu0 %v116
    %v205 = vpop.f32.mrb[0].mxu0
    %v206 = vadd.f32 %v102, %v205
    %v207 = vpop.f32.mrb[0].mxu0
    %v208 = vadd.f32 %v106, %v207
    %209 = vmatprep.mubr.f32.mxu0 0.0
    %210 = vmatmul.mubr.f32.gmra.mrb[0].mxu0 %v119
    %v211 = vpop.f32.mrb[0].mxu0
    %v212 = vadd.f32 %v102, %v211
    %v213 = vpop.f32.mrb[0].mxu0
    %v214 = vadd.f32 %v106, %v213
    %215 = vmatprep.mubr.f32.mxu0 0.0
    %216 = vmatmul.mubr.f32.gmra.mrb[0].mxu0 %v122
    %v217 = vpop.f32.mrb[0].mxu0
    %v218 = vadd.f32 %v102, %v217
    %v219 = vpop.f32.mrb[0].mxu0
    %v220 = vadd.f32 %v106, %v219
    %221 = vmatprep.mubr.f32.mxu0 0.0
    %222 = vmatmul.mubr.f32.gmra.mrb[0].mxu0 %v125
    %v223 = vpop.f32.mrb[0].mxu0
    %v224 = vadd.f32 %v102, %v223
    %v225 = vpop.f32.mrb[0].mxu0
    %v226 = vadd.f32 %v106, %v225
    %227 = vmatprep.mubr.f32.mxu0 0.0
    %228 = vmatmul.mubr.f32.gmra.mrb[0].mxu0 %v128
    %v229 = vpop.f32.mrb[0].mxu0
    %v230 = vadd.f32 %v102, %v229
    %v231 = vpop.f32.mrb[0].mxu0
    %v232 = vadd.f32 %v106, %v231
    %233 = vmatprep.mubr.f32.mxu0 0.0
    %234 = vmatmul.mubr.f32.gmra.mrb[0].mxu0 %v131
    %v235 = vpop.f32.mrb[0].mxu0
    %v236 = vadd.f32 %v102, %v235
    %v237 = vpop.f32.mrb[0].mxu0
    %v238 = vadd.f32 %v106, %v237
    %239 = vmatprep.mubr.f32.mxu0 0.0
    %240 = vmatmul.mubr.f32.gmra.mrb[0].mxu0 %v134
    %v241 = vpop.f32.mrb[0].mxu0
    %v242 = vadd.f32 %v102, %v241
    %v243 = vpop.f32.mrb[0].mxu0
    %v244 = vadd.f32 %v106, %v243
    %245 = vmatprep.mubr.f32.mxu0 0.0
    %246 = vmatmul.mubr.f32.gmra.mrb[0].mxu0 %v137
    %v247 = vpop.f32.mrb[0].mxu0
    %v248 = vadd.f32 %v102, %v247
    %v249 = vpop.f32.mrb[0].mxu0
    %v250 = vadd.f32 %v106, %v249
    %251 = vdwg.mxu0
    %252 = vmatprep.subr.mxu0 0.0
    %253 = vmatpush1.msra.mxu0 %v93
    %254 = vmatprep.subr.mxu0 0.0
    %255 = vmatpush1.msra.mxu0 %v96
    %256 = vmatprep.subr.mxu0 0.0
    %257 = vmatpush1.msra.mxu0 0.0
    %258 = vmatprep.subr.mxu0 0.0
    %259 = vmatpush1.msra.mxu0 0.0
    %260 = vmatprep.subr.mxu0 0.0
    %261 = vmatpush1.msra.mxu0 0.0
    %262 = vmatprep.subr.mxu0 0.0
    %263 = vmatpush1.msra.mxu0 0.0
    %264 = vmatprep.subr.mxu0 0.0
    %265 = vmatpush1.msra.mxu0 0.0
    %266 = vmatprep.subr.mxu0 0.0
    %267 = vmatpush1.msra.mxu0 0.0
    %268 = vmatprep.subr.mxu0 0.0
    %269 = vmatpush1.msra.mxu0 0.0
    %270 = vmatprep.subr.mxu0 0.0
    %271 = vmatpush1.msra.mxu0 0.0
    %272 = vmatprep.subr.mxu0 0.0
    %273 = vmatpush1.msra.mxu0 0.0
    %274 = vmatprep.subr.mxu0 0.0
    %275 = vmatpush1.msra.mxu0 0.0
    %276 = vmatprep.subr.mxu0 0.0
    %277 = vmatpush1.msra.mxu0 0.0
    %278 = vmatprep.subr.mxu0 0.0
    %279 = vmatpush1.msra.mxu0 0.0
    %280 = vmatprep.subr.mxu0 0.0
    %281 = vmatpush1.msra.mxu0 0.0
    %282 = vmatprep.subr.mxu0 0.0
    %283 = vmatpush1.msra.mxu0 0.0
    %284 = vmatprep.subr.mxu0 0.0
    %285 = vmatpush1.msra.mxu0 0.0
    %286 = vmatprep.subr.mxu0 0.0
    %287 = vmatpush1.msra.mxu0 0.0
    %288 = vmatprep.subr.mxu0 0.0
    %289 = vmatpush1.msra.mxu0 0.0
    %290 = vmatprep.subr.mxu0 0.0
    %291 = vmatpush1.msra.mxu0 0.0
    %292 = vmatprep.subr.mxu0 0.0
    %293 = vmatpush1.msra.mxu0 0.0
    %294 = vmatprep.subr.mxu0 0.0
    %295 = vmatpush1.msra.mxu0 0.0
    %296 = vmatprep.subr.mxu0 0.0
    %297 = vmatpush1.msra.mxu0 0.0
    %298 = vmatprep.subr.mxu0 0.0
    %299 = vmatpush1.msra.mxu0 0.0
    %300 = vmatprep.subr.mxu0 0.0
    %301 = vmatpush1.msra.mxu0 0.0
    %302 = vmatprep.subr.mxu0 0.0
    %303 = vmatpush1.msra.mxu0 0.0
    %304 = vmatprep.subr.mxu0 0.0
    %305 = vmatpush1.msra.mxu0 0.0
    %306 = vmatprep.subr.mxu0 0.0
    %307 = vmatpush1.msra.mxu0 0.0
    %308 = vmatprep.subr.mxu0 0.0
    %309 = vmatpush1.msra.mxu0 0.0
    %310 = vmatprep.subr.mxu0 0.0
    %311 = vmatpush1.msra.mxu0 0.0
    %312 = vmatprep.subr.mxu0 0.0
    %313 = vmatpush1.msra.mxu0 0.0
    %314 = vmatprep.subr.mxu0 0.0
    %315 = vmatpush1.msra.mxu0 0.0
    %316 = vmatprep.mubr.f32.mxu0 0.0
    %317 = vmatmul.mubr.f32.gmra.mrb[0].mxu0 %v116
    %v318 = vpop.f32.mrb[0].mxu0
    %v319 = vadd.f32 %v110, %v318
    %v320 = vpop.f32.mrb[0].mxu0
    %321 = vmatprep.mubr.f32.mxu0 0.0
    %322 = vmatmul.mubr.f32.gmra.mrb[0].mxu0 %v119
    %v323 = vpop.f32.mrb[0].mxu0
    %v324 = vadd.f32 %v110, %v323
    %v325 = vpop.f32.mrb[0].mxu0
    %326 = vmatprep.mubr.f32.mxu0 0.0
    %327 = vmatmul.mubr.f32.gmra.mrb[0].mxu0 %v122
    %v328 = vpop.f32.mrb[0].mxu0
    %v329 = vadd.f32 %v110, %v328
    %v330 = vpop.f32.mrb[0].mxu0
    %331 = vmatprep.mubr.f32.mxu0 0.0
    %332 = vmatmul.mubr.f32.gmra.mrb[0].mxu0 %v125
    %v333 = vpop.f32.mrb[0].mxu0
    %v334 = vadd.f32 %v110, %v333
    %v335 = vpop.f32.mrb[0].mxu0
    %336 = vmatprep.mubr.f32.mxu0 0.0
    %337 = vmatmul.mubr.f32.gmra.mrb[0].mxu0 %v128
    %v338 = vpop.f32.mrb[0].mxu0
    %v339 = vadd.f32 %v110, %v338
    %v340 = vpop.f32.mrb[0].mxu0
    %341 = vmatprep.mubr.f32.mxu0 0.0
    %342 = vmatmul.mubr.f32.gmra.mrb[0].mxu0 %v131
    %v343 = vpop.f32.mrb[0].mxu0
    %v344 = vadd.f32 %v110, %v343
    %v345 = vpop.f32.mrb[0].mxu0
    %346 = vmatprep.mubr.f32.mxu0 0.0
    %347 = vmatmul.mubr.f32.gmra.mrb[0].mxu0 %v134
    %v348 = vpop.f32.mrb[0].mxu0
    %v349 = vadd.f32 %v110, %v348
    %v350 = vpop.f32.mrb[0].mxu0
    %351 = vmatprep.mubr.f32.mxu0 0.0
    %352 = vmatmul.mubr.f32.gmra.mrb[0].mxu0 %v137
    %v353 = vpop.f32.mrb[0].mxu0
    %v354 = vadd.f32 %v110, %v353
    %v355 = vpop.f32.mrb[0].mxu0
    %356 = vdwg.mxu0
    %357 = vst [vmem:[#allocation2] sm:$0xff] %v206
    %358 = vst [vmem:[#allocation2 + $0x8] sm:$0xff] %v208
    %359 = vst [vmem:[#allocation2 + $0x10] sm:$0xff] %v319
    %360 = vst [vmem:[#allocation2 + $0x18] sm:$0xff] %v212
    %361 = vst [vmem:[#allocation2 + $0x20] sm:$0xff] %v214
    %362 = vst [vmem:[#allocation2 + $0x28] sm:$0xff] %v324
    %363 = vst [vmem:[#allocation2 + $0x30] sm:$0xff] %v218
    %364 = vst [vmem:[#allocation2 + $0x38] sm:$0xff] %v220
    %365 = vst [vmem:[#allocation2 + $0x40] sm:$0xff] %v329
    %366 = vst [vmem:[#allocation2 + $0x48] sm:$0xff] %v224
    %367 = vst [vmem:[#allocation2 + $0x50] sm:$0xff] %v226
    %368 = vst [vmem:[#allocation2 + $0x58] sm:$0xff] %v334
    %369 = vst [vmem:[#allocation2 + $0x60] sm:$0xff] %v230
    %370 = vst [vmem:[#allocation2 + $0x68] sm:$0xff] %v232
    %371 = vst [vmem:[#allocation2 + $0x70] sm:$0xff] %v339
    %372 = vst [vmem:[#allocation2 + $0x78] sm:$0xff] %v236
    %373 = vst [vmem:[#allocation2 + $0x80] sm:$0xff] %v238
    %374 = vst [vmem:[#allocation2 + $0x88] sm:$0xff] %v344
    %375 = vst [vmem:[#allocation2 + $0x90] sm:$0xff] %v242
    %376 = vst [vmem:[#allocation2 + $0x98] sm:$0xff] %v244
    %377 = vst [vmem:[#allocation2 + $0xa0] sm:$0xff] %v349
    %378 = vst [vmem:[#allocation2 + $0xa8] sm:$0xff] %v248
    %379 = vst [vmem:[#allocation2 + $0xb0] sm:$0xff] %v250
    %380 = vst [vmem:[#allocation2 + $0xb8] sm:$0xff] %v354
    %v381 = vld [vmem:[#allocation10] sm:$0xff]
    %v382 = vld [vmem:[#allocation10 + $0x8] sm:$0xff]
    %v383 = vld [vmem:[#allocation10 + $0x10] sm:$0xff]
    %v384 = vld [vmem:[#allocation10 + $0x18] sm:$0xff]
    %v385 = vld [vmem:[#allocation10 + $0x20] sm:$0xff]
    %v386 = vld [vmem:[#allocation10 + $0x28] sm:$0xff]
    %v387 = vld [vmem:[#allocation10 + $0x30] sm:$0xff]
    %v388 = vld [vmem:[#allocation10 + $0x38] sm:$0xff]
    %v389 = vld [vmem:[#allocation10 + $0x40] sm:$0xff]
    %v390 = vld [vmem:[#allocation10 + $0x48] sm:$0xff]
    %v391 = vld [vmem:[#allocation10 + $0x50] sm:$0xff]
    %v392 = vld [vmem:[#allocation10 + $0x58] sm:$0xff]
    %v393 = vld [vmem:[#allocation10 + $0x60] sm:$0xff]
    %v394 = vld [vmem:[#allocation10 + $0x68] sm:$0xff]
    %v395 = vld [vmem:[#allocation10 + $0x70] sm:$0xff]
    %v396 = vld [vmem:[#allocation10 + $0x78] sm:$0xff]
    %v397 = vld [vmem:[#allocation10 + $0x80] sm:$0xff]
    %v398 = vld [vmem:[#allocation10 + $0x88] sm:$0xff]
    %v399 = vld [vmem:[#allocation10 + $0x90] sm:$0xff]
    %v400 = vld [vmem:[#allocation10 + $0x98] sm:$0xff]
    %v401 = vld [vmem:[#allocation10 + $0xa0] sm:$0xff]
    %v402 = vld [vmem:[#allocation10 + $0xa8] sm:$0xff]
    %v403 = vld [vmem:[#allocation10 + $0xb0] sm:$0xff]
    %v404 = vld [vmem:[#allocation10 + $0xb8] sm:$0xff]
    %v405 = vld [vmem:[#allocation10 + $0xc0] sm:$0xff]
    %v406 = vld [vmem:[#allocation10 + $0xc8] sm:$0xff]
    %v407 = vld [vmem:[#allocation10 + $0xd0] sm:$0xff]
    %v408 = vld [vmem:[#allocation10 + $0xd8] sm:$0xff]
    %v409 = vld [vmem:[#allocation10 + $0xe0] sm:$0xff]
    %v410 = vld [vmem:[#allocation10 + $0xe8] sm:$0xff]
    %v411 = vld [vmem:[#allocation10 + $0xf0] sm:$0xff]
    %v412 = vld [vmem:[#allocation10 + $0xf8] sm:$0xff]
    %v413 = vld [vmem:[#allocation10 + $0x100] sm:$0xff]
    %v414 = vld [vmem:[#allocation10 + $0x108] sm:$0xff]
    %v415 = vld [vmem:[#allocation10 + $0x110] sm:$0xff]
    %v416 = vld [vmem:[#allocation10 + $0x118] sm:$0xff]
    %v417 = vld [vmem:[#allocation10 + $0x120] sm:$0xff]
    %v418 = vld [vmem:[#allocation10 + $0x128] sm:$0xff]
    %v419 = vld [vmem:[#allocation10 + $0x130] sm:$0xff]
    %v420 = vld [vmem:[#allocation10 + $0x138] sm:$0xff]
    %v421 = vld [vmem:[#allocation10 + $0x140] sm:$0xff]
    %v422 = vld [vmem:[#allocation10 + $0x148] sm:$0xff]
    %v423 = vld [vmem:[#allocation10 + $0x150] sm:$0xff]
    %v424 = vld [vmem:[#allocation10 + $0x158] sm:$0xff]
    %v425 = vld [vmem:[#allocation10 + $0x160] sm:$0xff]
    %v426 = vld [vmem:[#allocation10 + $0x168] sm:$0xff]
    %v427 = vld [vmem:[#allocation10 + $0x170] sm:$0xff]
    %v428 = vld [vmem:[#allocation10 + $0x178] sm:$0xff]
    %v429 = vld [vmem:[%s5] sm:$0x1]
    %v430 = vld [vmem:[#allocation3] sm:$0xff]
    %v431 = vld [vmem:[#allocation2] sm:$0xff]
    %v432 = vld [vmem:[#allocation2 + $0x8] sm:$0xff]
    %v433 = vld [vmem:[#allocation2 + $0x10] sm:$0xff]
    %434 = vmatprep.subr.mxu0 %v382
    %435 = vmatpush1.msra.mxu0 %v381
    %436 = vmatprep.subr.mxu0 %v385
    %437 = vmatpush1.msra.mxu0 %v384
    %438 = vmatprep.subr.mxu0 %v388
    %439 = vmatpush1.msra.mxu0 %v387
    %440 = vmatprep.subr.mxu0 %v391
    %441 = vmatpush1.msra.mxu0 %v390
    %442 = vmatprep.subr.mxu0 %v394
    %443 = vmatpush1.msra.mxu0 %v393
    %444 = vmatprep.subr.mxu0 %v397
    %445 = vmatpush1.msra.mxu0 %v396
    %446 = vmatprep.subr.mxu0 %v400
    %447 = vmatpush1.msra.mxu0 %v399
    %448 = vmatprep.subr.mxu0 %v403
    %449 = vmatpush1.msra.mxu0 %v402
    %450 = vmatprep.subr.mxu0 %v406
    %451 = vmatpush1.msra.mxu0 %v405
    %452 = vmatprep.subr.mxu0 %v409
    %453 = vmatpush1.msra.mxu0 %v408
    %454 = vmatprep.subr.mxu0 %v412
    %455 = vmatpush1.msra.mxu0 %v411
    %456 = vmatprep.subr.mxu0 %v415
    %457 = vmatpush1.msra.mxu0 %v414
    %458 = vmatprep.subr.mxu0 %v418
    %459 = vmatpush1.msra.mxu0 %v417
    %460 = vmatprep.subr.mxu0 %v421
    %461 = vmatpush1.msra.mxu0 %v420
    %462 = vmatprep.subr.mxu0 %v424
    %463 = vmatpush1.msra.mxu0 %v423
    %464 = vmatprep.subr.mxu0 %v427
    %465 = vmatpush1.msra.mxu0 %v426
    %466 = vmatprep.subr.mxu0 0.0
    %467 = vmatpush1.msra.mxu0 0.0
    %468 = vmatprep.subr.mxu0 0.0
    %469 = vmatpush1.msra.mxu0 0.0
    %470 = vmatprep.subr.mxu0 0.0
    %471 = vmatpush1.msra.mxu0 0.0
    %472 = vmatprep.subr.mxu0 0.0
    %473 = vmatpush1.msra.mxu0 0.0
    %474 = vmatprep.subr.mxu0 0.0
    %475 = vmatpush1.msra.mxu0 0.0
    %476 = vmatprep.subr.mxu0 0.0
    %477 = vmatpush1.msra.mxu0 0.0
    %478 = vmatprep.subr.mxu0 0.0
    %479 = vmatpush1.msra.mxu0 0.0
    %480 = vmatprep.subr.mxu0 0.0
    %481 = vmatpush1.msra.mxu0 0.0
    %482 = vmatprep.subr.mxu0 0.0
    %483 = vmatpush1.msra.mxu0 0.0
    %484 = vmatprep.subr.mxu0 0.0
    %485 = vmatpush1.msra.mxu0 0.0
    %486 = vmatprep.subr.mxu0 0.0
    %487 = vmatpush1.msra.mxu0 0.0
    %488 = vmatprep.subr.mxu0 0.0
    %489 = vmatpush1.msra.mxu0 0.0
    %490 = vmatprep.subr.mxu0 0.0
    %491 = vmatpush1.msra.mxu0 0.0
    %492 = vmatprep.subr.mxu0 0.0
    %493 = vmatpush1.msra.mxu0 0.0
    %494 = vmatprep.subr.mxu0 0.0
    %495 = vmatpush1.msra.mxu0 0.0
    %496 = vmatprep.subr.mxu0 0.0
    %497 = vmatpush1.msra.mxu0 0.0
    %498 = vmatprep.mubr.f32.mxu0 0.0
    %499 = vmatmul.mubr.f32.gmra.mrb[0].mxu0 %v430
    %v500 = vpop.f32.mrb[0].mxu0
    %v501 = vadd.f32 0.0, %v500
    %v502 = vpop.f32.mrb[0].mxu0
    %v503 = vadd.f32 0.0, %v502
    %504 = vdwg.mxu0
    %505 = vmatprep.subr.mxu0 0.0
    %506 = vmatpush1.msra.mxu0 %v383
    %507 = vmatprep.subr.mxu0 0.0
    %508 = vmatpush1.msra.mxu0 %v386
    %509 = vmatprep.subr.mxu0 0.0
    %510 = vmatpush1.msra.mxu0 %v389
    %511 = vmatprep.subr.mxu0 0.0
    %512 = vmatpush1.msra.mxu0 %v392
    %513 = vmatprep.subr.mxu0 0.0
    %514 = vmatpush1.msra.mxu0 %v395
    %515 = vmatprep.subr.mxu0 0.0
    %516 = vmatpush1.msra.mxu0 %v398
    %517 = vmatprep.subr.mxu0 0.0
    %518 = vmatpush1.msra.mxu0 %v401
    %519 = vmatprep.subr.mxu0 0.0
    %520 = vmatpush1.msra.mxu0 %v404
    %521 = vmatprep.subr.mxu0 0.0
    %522 = vmatpush1.msra.mxu0 %v407
    %523 = vmatprep.subr.mxu0 0.0
    %524 = vmatpush1.msra.mxu0 %v410
    %525 = vmatprep.subr.mxu0 0.0
    %526 = vmatpush1.msra.mxu0 %v413
    %527 = vmatprep.subr.mxu0 0.0
    %528 = vmatpush1.msra.mxu0 %v416
    %529 = vmatprep.subr.mxu0 0.0
    %530 = vmatpush1.msra.mxu0 %v419
    %531 = vmatprep.subr.mxu0 0.0
    %532 = vmatpush1.msra.mxu0 %v422
    %533 = vmatprep.subr.mxu0 0.0
    %534 = vmatpush1.msra.mxu0 %v425
    %535 = vmatprep.subr.mxu0 0.0
    %536 = vmatpush1.msra.mxu0 %v428
    %537 = vmatprep.subr.mxu0 0.0
    %538 = vmatpush1.msra.mxu0 0.0
    %539 = vmatprep.subr.mxu0 0.0
    %540 = vmatpush1.msra.mxu0 0.0
    %541 = vmatprep.subr.mxu0 0.0
    %542 = vmatpush1.msra.mxu0 0.0
    %543 = vmatprep.subr.mxu0 0.0
    %544 = vmatpush1.msra.mxu0 0.0
    %545 = vmatprep.subr.mxu0 0.0
    %546 = vmatpush1.msra.mxu0 0.0
    %547 = vmatprep.subr.mxu0 0.0
    %548 = vmatpush1.msra.mxu0 0.0
    %549 = vmatprep.subr.mxu0 0.0
    %550 = vmatpush1.msra.mxu0 0.0
    %551 = vmatprep.subr.mxu0 0.0
    %552 = vmatpush1.msra.mxu0 0.0
    %553 = vmatprep.subr.mxu0 0.0
    %554 = vmatpush1.msra.mxu0 0.0
    %555 = vmatprep.subr.mxu0 0.0
    %556 = vmatpush1.msra.mxu0 0.0
    %557 = vmatprep.subr.mxu0 0.0
    %558 = vmatpush1.msra.mxu0 0.0
    %559 = vmatprep.subr.mxu0 0.0
    %560 = vmatpush1.msra.mxu0 0.0
    %561 = vmatprep.subr.mxu0 0.0
    %562 = vmatpush1.msra.mxu0 0.0
    %563 = vmatprep.subr.mxu0 0.0
    %564 = vmatpush1.msra.mxu0 0.0
    %565 = vmatprep.subr.mxu0 0.0
    %566 = vmatpush1.msra.mxu0 0.0
    %567 = vmatprep.subr.mxu0 0.0
    %568 = vmatpush1.msra.mxu0 0.0
    %569 = vmatprep.mubr.f32.mxu0 0.0
    %570 = vmatmul.mubr.f32.gmra.mrb[0].mxu0 %v430
    %v571 = vpop.f32.mrb[0].mxu0
    %v572 = vadd.f32 0.0, %v571
    %v573 = vpop.f32.mrb[0].mxu0
    %574 = vdwg.mxu0
    %v575 = vadd.f32 %v431, %v501
    %v576 = vxor.u32 %v575, 2147483648
    %v577 = vmul.f32 %v576, 1.442695
    %v578 = vpow.pop %v577
    %v579 = vadd.f32 %v578, 1.0
    %v580 = vrcp.pop %v579
    %v581 = vmul.f32 1.0, %v580
    %v582 = vadd.f32 %v432, %v503
    %v583 = vxor.u32 %v582, 2147483648
    %v584 = vmul.f32 %v583, 1.442695
    %v585 = vpow.pop %v584
    %v586 = vadd.f32 %v585, 1.0
    %v587 = vrcp.pop %v586
    %v588 = vmul.f32 1.0, %v587
    %v590 = vlaneseq
    %v591 = vshrl.u32 %v590, 7
    %v592 = vsub.s32 0, %v591
    %v593 = vrot.slane %v429, %v592
    %v595 = vadd.f32 %v572, %v593
    %v596 = vmul.f32 %v581, %v595
    %v597 = vadd.f32 %v433, %v596
    %v598 = vtanh.pop %v597
    %v599 = vsub.f32 1.0, %v588
    %v600 = vmul.f32 %v599, %v598
    %v601 = vmul.f32 %v588, %v430
    %v602 = vadd.f32 %v600, %v601
    %603 = vst [vmem:[#allocation12] sm:$0xff] %v602
    %s604 = scalar_lea.vmem [#allocation2], 24
    %v605 = vld [vmem:[%s604] sm:$0xff]
    %v606 = vld [vmem:[%s604 + $0x8] sm:$0xff]
    %v607 = vld [vmem:[%s604 + $0x10] sm:$0xff]
    %608 = vmatprep.subr.mxu0 %v382
    %609 = vmatpush1.msra.mxu0 %v381
    %610 = vmatprep.subr.mxu0 %v385
    %611 = vmatpush1.msra.mxu0 %v384
    %612 = vmatprep.subr.mxu0 %v388
    %613 = vmatpush1.msra.mxu0 %v387
    %614 = vmatprep.subr.mxu0 %v391
    %615 = vmatpush1.msra.mxu0 %v390
    %616 = vmatprep.subr.mxu0 %v394
    %617 = vmatpush1.msra.mxu0 %v393
    %618 = vmatprep.subr.mxu0 %v397
    %619 = vmatpush1.msra.mxu0 %v396
    %620 = vmatprep.subr.mxu0 %v400
    %621 = vmatpush1.msra.mxu0 %v399
    %622 = vmatprep.subr.mxu0 %v403
    %623 = vmatpush1.msra.mxu0 %v402
    %624 = vmatprep.subr.mxu0 %v406
    %625 = vmatpush1.msra.mxu0 %v405
    %626 = vmatprep.subr.mxu0 %v409
    %627 = vmatpush1.msra.mxu0 %v408
    %628 = vmatprep.subr.mxu0 %v412
    %629 = vmatpush1.msra.mxu0 %v411
    %630 = vmatprep.subr.mxu0 %v415
    %631 = vmatpush1.msra.mxu0 %v414
    %632 = vmatprep.subr.mxu0 %v418
    %633 = vmatpush1.msra.mxu0 %v417
    %634 = vmatprep.subr.mxu0 %v421
    %635 = vmatpush1.msra.mxu0 %v420
    %636 = vmatprep.subr.mxu0 %v424
    %637 = vmatpush1.msra.mxu0 %v423
    %638 = vmatprep.subr.mxu0 %v427
    %639 = vmatpush1.msra.mxu0 %v426
    %640 = vmatprep.subr.mxu0 0.0
    %641 = vmatpush1.msra.mxu0 0.0
    %642 = vmatprep.subr.mxu0 0.0
    %643 = vmatpush1.msra.mxu0 0.0
    %644 = vmatprep.subr.mxu0 0.0
    %645 = vmatpush1.msra.mxu0 0.0
    %646 = vmatprep.subr.mxu0 0.0
    %647 = vmatpush1.msra.mxu0 0.0
    %648 = vmatprep.subr.mxu0 0.0
    %649 = vmatpush1.msra.mxu0 0.0
    %650 = vmatprep.subr.mxu0 0.0
    %651 = vmatpush1.msra.mxu0 0.0
    %652 = vmatprep.subr.mxu0 0.0
    %653 = vmatpush1.msra.mxu0 0.0
    %654 = vmatprep.subr.mxu0 0.0
    %655 = vmatpush1.msra.mxu0 0.0
    %656 = vmatprep.subr.mxu0 0.0
    %657 = vmatpush1.msra.mxu0 0.0
    %658 = vmatprep.subr.mxu0 0.0
    %659 = vmatpush1.msra.mxu0 0.0
    %660 = vmatprep.subr.mxu0 0.0
    %661 = vmatpush1.msra.mxu0 0.0
    %662 = vmatprep.subr.mxu0 0.0
    %663 = vmatpush1.msra.mxu0 0.0
    %664 = vmatprep.subr.mxu0 0.0
    %665 = vmatpush1.msra.mxu0 0.0
    %666 = vmatprep.subr.mxu0 0.0
    %667 = vmatpush1.msra.mxu0 0.0
    %668 = vmatprep.subr.mxu0 0.0
    %669 = vmatpush1.msra.mxu0 0.0
    %670 = vmatprep.subr.mxu0 0.0
    %671 = vmatpush1.msra.mxu0 0.0
    %672 = vmatprep.mubr.f32.mxu0 0.0
    %673 = vmatmul.mubr.f32.gmra.mrb[0].mxu0 %v602
    %v674 = vpop.f32.mrb[0].mxu0
    %v675 = vadd.f32 0.0, %v674
    %v676 = vpop.f32.mrb[0].mxu0
    %v677 = vadd.f32 0.0, %v676
    %678 = vdwg.mxu0
    %679 = vmatprep.subr.mxu0 0.0
    %680 = vmatpush1.msra.mxu0 %v383
    %681 = vmatprep.subr.mxu0 0.0
    %682 = vmatpush1.msra.mxu0 %v386
    %683 = vmatprep.subr.mxu0 0.0
    %684 = vmatpush1.msra.mxu0 %v389
    %685 = vmatprep.subr.mxu0 0.0
    %686 = vmatpush1.msra.mxu0 %v392
    %687 = vmatprep.subr.mxu0 0.0
    %688 = vmatpush1.msra.mxu0 %v395
    %689 = vmatprep.subr.mxu0 0.0
    %690 = vmatpush1.msra.mxu0 %v398
    %691 = vmatprep.subr.mxu0 0.0
    %692 = vmatpush1.msra.mxu0 %v401
    %693 = vmatprep.subr.mxu0 0.0
    %694 = vmatpush1.msra.mxu0 %v404
    %695 = vmatprep.subr.mxu0 0.0
    %696 = vmatpush1.msra.mxu0 %v407
    %697 = vmatprep.subr.mxu0 0.0
    %698 = vmatpush1.msra.mxu0 %v410
    %699 = vmatprep.subr.mxu0 0.0
    %700 = vmatpush1.msra.mxu0 %v413
    %701 = vmatprep.subr.mxu0 0.0
    %702 = vmatpush1.msra.mxu0 %v416
    %703 = vmatprep.subr.mxu0 0.0
    %704 = vmatpush1.msra.mxu0 %v419
    %705 = vmatprep.subr.mxu0 0.0
    %706 = vmatpush1.msra.mxu0 %v422
    %707 = vmatprep.subr.mxu0 0.0
    %708 = vmatpush1.msra.mxu0 %v425
    %709 = vmatprep.subr.mxu0 0.0
    %710 = vmatpush1.msra.mxu0 %v428
    %711 = vmatprep.subr.mxu0 0.0
    %712 = vmatpush1.msra.mxu0 0.0
    %713 = vmatprep.subr.mxu0 0.0
    %714 = vmatpush1.msra.mxu0 0.0
    %715 = vmatprep.subr.mxu0 0.0
    %716 = vmatpush1.msra.mxu0 0.0
    %717 = vmatprep.subr.mxu0 0.0
    %718 = vmatpush1.msra.mxu0 0.0
    %719 = vmatprep.subr.mxu0 0.0
    %720 = vmatpush1.msra.mxu0 0.0
    %721 = vmatprep.subr.mxu0 0.0
    %722 = vmatpush1.msra.mxu0 0.0
    %723 = vmatprep.subr.mxu0 0.0
    %724 = vmatpush1.msra.mxu0 0.0
    %725 = vmatprep.subr.mxu0 0.0
    %726 = vmatpush1.msra.mxu0 0.0
    %727 = vmatprep.subr.mxu0 0.0
    %728 = vmatpush1.msra.mxu0 0.0
    %729 = vmatprep.subr.mxu0 0.0
    %730 = vmatpush1.msra.mxu0 0.0
    %731 = vmatprep.subr.mxu0 0.0
    %732 = vmatpush1.msra.mxu0 0.0
    %733 = vmatprep.subr.mxu0 0.0
    %734 = vmatpush1.msra.mxu0 0.0
    %735 = vmatprep.subr.mxu0 0.0
    %736 = vmatpush1.msra.mxu0 0.0
    %737 = vmatprep.subr.mxu0 0.0
    %738 = vmatpush1.msra.mxu0 0.0
    %739 = vmatprep.subr.mxu0 0.0
    %740 = vmatpush1.msra.mxu0 0.0
    %741 = vmatprep.subr.mxu0 0.0
    %742 = vmatpush1.msra.mxu0 0.0
    %743 = vmatprep.mubr.f32.mxu0 0.0
    %744 = vmatmul.mubr.f32.gmra.mrb[0].mxu0 %v602
    %v745 = vpop.f32.mrb[0].mxu0
    %v746 = vadd.f32 0.0, %v745
    %v747 = vpop.f32.mrb[0].mxu0
    %748 = vdwg.mxu0
    %v749 = vadd.f32 %v605, %v675
    %v750 = vxor.u32 %v749, 2147483648
    %v751 = vmul.f32 %v750, 1.442695
    %v752 = vpow.pop %v751
    %v753 = vadd.f32 %v752, 1.0
    %v754 = vrcp.pop %v753
    %v755 = vmul.f32 1.0, %v754
    %v756 = vadd.f32 %v606, %v677
    %v757 = vxor.u32 %v756, 2147483648
    %v758 = vmul.f32 %v757, 1.442695
    %v759 = vpow.pop %v758
    %v760 = vadd.f32 %v759, 1.0
    %v761 = vrcp.pop %v760
    %v762 = vmul.f32 1.0, %v761
    %v763 = vadd.f32 %v746, %v593
    %v764 = vmul.f32 %v755, %v763
    %v765 = vadd.f32 %v607, %v764
    %v766 = vtanh.pop %v765
    %v767 = vsub.f32 1.0, %v762
    %v768 = vmul.f32 %v767, %v766
    %v769 = vmul.f32 %v762, %v602
    %v770 = vadd.f32 %v768, %v769
    %s771 = scalar_lea.vmem [#allocation12], 8
    %772 = vst [vmem:[%s771] sm:$0xff] %v770
    %s773 = scalar_lea.vmem [#allocation2], 48
    %v774 = vld [vmem:[%s773] sm:$0xff]
    %v775 = vld [vmem:[%s773 + $0x8] sm:$0xff]
    %v776 = vld [vmem:[%s773 + $0x10] sm:$0xff]
    %777 = vmatprep.subr.mxu0 %v382
    %778 = vmatpush1.msra.mxu0 %v381
    %779 = vmatprep.subr.mxu0 %v385
    %780 = vmatpush1.msra.mxu0 %v384
    %781 = vmatprep.subr.mxu0 %v388
    %782 = vmatpush1.msra.mxu0 %v387
    %783 = vmatprep.subr.mxu0 %v391
    %784 = vmatpush1.msra.mxu0 %v390
    %785 = vmatprep.subr.mxu0 %v394
    %786 = vmatpush1.msra.mxu0 %v393
    %787 = vmatprep.subr.mxu0 %v397
    %788 = vmatpush1.msra.mxu0 %v396
    %789 = vmatprep.subr.mxu0 %v400
    %790 = vmatpush1.msra.mxu0 %v399
    %791 = vmatprep.subr.mxu0 %v403
    %792 = vmatpush1.msra.mxu0 %v402
    %793 = vmatprep.subr.mxu0 %v406
    %794 = vmatpush1.msra.mxu0 %v405
    %795 = vmatprep.subr.mxu0 %v409
    %796 = vmatpush1.msra.mxu0 %v408
    %797 = vmatprep.subr.mxu0 %v412
    %798 = vmatpush1.msra.mxu0 %v411
    %799 = vmatprep.subr.mxu0 %v415
    %800 = vmatpush1.msra.mxu0 %v414
    %801 = vmatprep.subr.mxu0 %v418
    %802 = vmatpush1.msra.mxu0 %v417
    %803 = vmatprep.subr.mxu0 %v421
    %804 = vmatpush1.msra.mxu0 %v420
    %805 = vmatprep.subr.mxu0 %v424
    %806 = vmatpush1.msra.mxu0 %v423
    %807 = vmatprep.subr.mxu0 %v427
    %808 = vmatpush1.msra.mxu0 %v426
    %809 = vmatprep.subr.mxu0 0.0
    %810 = vmatpush1.msra.mxu0 0.0
    %811 = vmatprep.subr.mxu0 0.0
    %812 = vmatpush1.msra.mxu0 0.0
    %813 = vmatprep.subr.mxu0 0.0
    %814 = vmatpush1.msra.mxu0 0.0
    %815 = vmatprep.subr.mxu0 0.0
    %816 = vmatpush1.msra.mxu0 0.0
    %817 = vmatprep.subr.mxu0 0.0
    %818 = vmatpush1.msra.mxu0 0.0
    %819 = vmatprep.subr.mxu0 0.0
    %820 = vmatpush1.msra.mxu0 0.0
    %821 = vmatprep.subr.mxu0 0.0
    %822 = vmatpush1.msra.mxu0 0.0
    %823 = vmatprep.subr.mxu0 0.0
    %824 = vmatpush1.msra.mxu0 0.0
    %825 = vmatprep.subr.mxu0 0.0
    %826 = vmatpush1.msra.mxu0 0.0
    %827 = vmatprep.subr.mxu0 0.0
    %828 = vmatpush1.msra.mxu0 0.0
    %829 = vmatprep.subr.mxu0 0.0
    %830 = vmatpush1.msra.mxu0 0.0
    %831 = vmatprep.subr.mxu0 0.0
    %832 = vmatpush1.msra.mxu0 0.0
    %833 = vmatprep.subr.mxu0 0.0
    %834 = vmatpush1.msra.mxu0 0.0
    %835 = vmatprep.subr.mxu0 0.0
    %836 = vmatpush1.msra.mxu0 0.0
    %837 = vmatprep.subr.mxu0 0.0
    %838 = vmatpush1.msra.mxu0 0.0
    %839 = vmatprep.subr.mxu0 0.0
    %840 = vmatpush1.msra.mxu0 0.0
    %841 = vmatprep.mubr.f32.mxu0 0.0
    %842 = vmatmul.mubr.f32.gmra.mrb[0].mxu0 %v770
    %v843 = vpop.f32.mrb[0].mxu0
    %v844 = vadd.f32 0.0, %v843
    %v845 = vpop.f32.mrb[0].mxu0
    %v846 = vadd.f32 0.0, %v845
    %847 = vdwg.mxu0
    %848 = vmatprep.subr.mxu0 0.0
    %849 = vmatpush1.msra.mxu0 %v383
    %850 = vmatprep.subr.mxu0 0.0
    %851 = vmatpush1.msra.mxu0 %v386
    %852 = vmatprep.subr.mxu0 0.0
    %853 = vmatpush1.msra.mxu0 %v389
    %854 = vmatprep.subr.mxu0 0.0
    %855 = vmatpush1.msra.mxu0 %v392
    %856 = vmatprep.subr.mxu0 0.0
    %857 = vmatpush1.msra.mxu0 %v395
    %858 = vmatprep.subr.mxu0 0.0
    %859 = vmatpush1.msra.mxu0 %v398
    %860 = vmatprep.subr.mxu0 0.0
    %861 = vmatpush1.msra.mxu0 %v401
    %862 = vmatprep.subr.mxu0 0.0
    %863 = vmatpush1.msra.mxu0 %v404
    %864 = vmatprep.subr.mxu0 0.0
    %865 = vmatpush1.msra.mxu0 %v407
    %866 = vmatprep.subr.mxu0 0.0
    %867 = vmatpush1.msra.mxu0 %v410
    %868 = vmatprep.subr.mxu0 0.0
    %869 = vmatpush1.msra.mxu0 %v413
    %870 = vmatprep.subr.mxu0 0.0
    %871 = vmatpush1.msra.mxu0 %v416
    %872 = vmatprep.subr.mxu0 0.0
    %873 = vmatpush1.msra.mxu0 %v419
    %874 = vmatprep.subr.mxu0 0.0
    %875 = vmatpush1.msra.mxu0 %v422
    %876 = vmatprep.subr.mxu0 0.0
    %877 = vmatpush1.msra.mxu0 %v425
    %878 = vmatprep.subr.mxu0 0.0
    %879 = vmatpush1.msra.mxu0 %v428
    %880 = vmatprep.subr.mxu0 0.0
    %881 = vmatpush1.msra.mxu0 0.0
    %882 = vmatprep.subr.mxu0 0.0
    %883 = vmatpush1.msra.mxu0 0.0
    %884 = vmatprep.subr.mxu0 0.0
    %885 = vmatpush1.msra.mxu0 0.0
    %886 = vmatprep.subr.mxu0 0.0
    %887 = vmatpush1.msra.mxu0 0.0
    %888 = vmatprep.subr.mxu0 0.0
    %889 = vmatpush1.msra.mxu0 0.0
    %890 = vmatprep.subr.mxu0 0.0
    %891 = vmatpush1.msra.mxu0 0.0
    %892 = vmatprep.subr.mxu0 0.0
    %893 = vmatpush1.msra.mxu0 0.0
    %894 = vmatprep.subr.mxu0 0.0
    %895 = vmatpush1.msra.mxu0 0.0
    %896 = vmatprep.subr.mxu0 0.0
    %897 = vmatpush1.msra.mxu0 0.0
    %898 = vmatprep.subr.mxu0 0.0
    %899 = vmatpush1.msra.mxu0 0.0
    %900 = vmatprep.subr.mxu0 0.0
    %901 = vmatpush1.msra.mxu0 0.0
    %902 = vmatprep.subr.mxu0 0.0
    %903 = vmatpush1.msra.mxu0 0.0
    %904 = vmatprep.subr.mxu0 0.0
    %905 = vmatpush1.msra.mxu0 0.0
    %906 = vmatprep.subr.mxu0 0.0
    %907 = vmatpush1.msra.mxu0 0.0
    %908 = vmatprep.subr.mxu0 0.0
    %909 = vmatpush1.msra.mxu0 0.0
    %910 = vmatprep.subr.mxu0 0.0
    %911 = vmatpush1.msra.mxu0 0.0
    %912 = vmatprep.mubr.f32.mxu0 0.0
    %913 = vmatmul.mubr.f32.gmra.mrb[0].mxu0 %v770
    %v914 = vpop.f32.mrb[0].mxu0
    %v915 = vadd.f32 0.0, %v914
    %v916 = vpop.f32.mrb[0].mxu0
    %917 = vdwg.mxu0
    %v918 = vadd.f32 %v774, %v844
    %v919 = vxor.u32 %v918, 2147483648
    %v920 = vmul.f32 %v919, 1.442695
    %v921 = vpow.pop %v920
    %v922 = vadd.f32 %v921, 1.0
    %v923 = vrcp.pop %v922
    %v924 = vmul.f32 1.0, %v923
    %v925 = vadd.f32 %v775, %v846
    %v926 = vxor.u32 %v925, 2147483648
    %v927 = vmul.f32 %v926, 1.442695
    %v928 = vpow.pop %v927
    %v929 = vadd.f32 %v928, 1.0
    %v930 = vrcp.pop %v929
    %v931 = vmul.f32 1.0, %v930
    %v932 = vadd.f32 %v915, %v593
    %v933 = vmul.f32 %v924, %v932
    %v934 = vadd.f32 %v776, %v933
    %v935 = vtanh.pop %v934
    %v936 = vsub.f32 1.0, %v931
    %v937 = vmul.f32 %v936, %v935
    %v938 = vmul.f32 %v931, %v770
    %v939 = vadd.f32 %v937, %v938
    %s940 = scalar_lea.vmem [#allocation12], 16
    %941 = vst [vmem:[%s940] sm:$0xff] %v939
    %s942 = scalar_lea.vmem [#allocation2], 72
    %v943 = vld [vmem:[%s942] sm:$0xff]
    %v944 = vld [vmem:[%s942 + $0x8] sm:$0xff]
    %v945 = vld [vmem:[%s942 + $0x10] sm:$0xff]
    %946 = vmatprep.subr.mxu0 %v382
    %947 = vmatpush1.msra.mxu0 %v381
    %948 = vmatprep.subr.mxu0 %v385
    %949 = vmatpush1.msra.mxu0 %v384
    %950 = vmatprep.subr.mxu0 %v388
    %951 = vmatpush1.msra.mxu0 %v387
    %952 = vmatprep.subr.mxu0 %v391
    %953 = vmatpush1.msra.mxu0 %v390
    %954 = vmatprep.subr.mxu0 %v394
    %955 = vmatpush1.msra.mxu0 %v393
    %956 = vmatprep.subr.mxu0 %v397
    %957 = vmatpush1.msra.mxu0 %v396
    %958 = vmatprep.subr.mxu0 %v400
    %959 = vmatpush1.msra.mxu0 %v399
    %960 = vmatprep.subr.mxu0 %v403
    %961 = vmatpush1.msra.mxu0 %v402
    %962 = vmatprep.subr.mxu0 %v406
    %963 = vmatpush1.msra.mxu0 %v405
    %964 = vmatprep.subr.mxu0 %v409
    %965 = vmatpush1.msra.mxu0 %v408
    %966 = vmatprep.subr.mxu0 %v412
    %967 = vmatpush1.msra.mxu0 %v411
    %968 = vmatprep.subr.mxu0 %v415
    %969 = vmatpush1.msra.mxu0 %v414
    %970 = vmatprep.subr.mxu0 %v418
    %971 = vmatpush1.msra.mxu0 %v417
    %972 = vmatprep.subr.mxu0 %v421
    %973 = vmatpush1.msra.mxu0 %v420
    %974 = vmatprep.subr.mxu0 %v424
    %975 = vmatpush1.msra.mxu0 %v423
    %976 = vmatprep.subr.mxu0 %v427
    %977 = vmatpush1.msra.mxu0 %v426
    %978 = vmatprep.subr.mxu0 0.0
    %979 = vmatpush1.msra.mxu0 0.0
    %980 = vmatprep.subr.mxu0 0.0
    %981 = vmatpush1.msra.mxu0 0.0
    %982 = vmatprep.subr.mxu0 0.0
    %983 = vmatpush1.msra.mxu0 0.0
    %984 = vmatprep.subr.mxu0 0.0
    %985 = vmatpush1.msra.mxu0 0.0
    %986 = vmatprep.subr.mxu0 0.0
    %987 = vmatpush1.msra.mxu0 0.0
    %988 = vmatprep.subr.mxu0 0.0
    %989 = vmatpush1.msra.mxu0 0.0
    %990 = vmatprep.subr.mxu0 0.0
    %991 = vmatpush1.msra.mxu0 0.0
    %992 = vmatprep.subr.mxu0 0.0
    %993 = vmatpush1.msra.mxu0 0.0
    %994 = vmatprep.subr.mxu0 0.0
    %995 = vmatpush1.msra.mxu0 0.0
    %996 = vmatprep.subr.mxu0 0.0
    %997 = vmatpush1.msra.mxu0 0.0
    %998 = vmatprep.subr.mxu0 0.0
    %999 = vmatpush1.msra.mxu0 0.0
    %1000 = vmatprep.subr.mxu0 0.0
    %1001 = vmatpush1.msra.mxu0 0.0
    %1002 = vmatprep.subr.mxu0 0.0
    %1003 = vmatpush1.msra.mxu0 0.0
    %1004 = vmatprep.subr.mxu0 0.0
    %1005 = vmatpush1.msra.mxu0 0.0
    %1006 = vmatprep.subr.mxu0 0.0
    %1007 = vmatpush1.msra.mxu0 0.0
    %1008 = vmatprep.subr.mxu0 0.0
    %1009 = vmatpush1.msra.mxu0 0.0
    %1010 = vmatprep.mubr.f32.mxu0 0.0
    %1011 = vmatmul.mubr.f32.gmra.mrb[0].mxu0 %v939
    %v1012 = vpop.f32.mrb[0].mxu0
    %v1013 = vadd.f32 0.0, %v1012
    %v1014 = vpop.f32.mrb[0].mxu0
    %v1015 = vadd.f32 0.0, %v1014
    %1016 = vdwg.mxu0
    %1017 = vmatprep.subr.mxu0 0.0
    %1018 = vmatpush1.msra.mxu0 %v383
    %1019 = vmatprep.subr.mxu0 0.0
    %1020 = vmatpush1.msra.mxu0 %v386
    %1021 = vmatprep.subr.mxu0 0.0
    %1022 = vmatpush1.msra.mxu0 %v389
    %1023 = vmatprep.subr.mxu0 0.0
    %1024 = vmatpush1.msra.mxu0 %v392
    %1025 = vmatprep.subr.mxu0 0.0
    %1026 = vmatpush1.msra.mxu0 %v395
    %1027 = vmatprep.subr.mxu0 0.0
    %1028 = vmatpush1.msra.mxu0 %v398
    %1029 = vmatprep.subr.mxu0 0.0
    %1030 = vmatpush1.msra.mxu0 %v401
    %1031 = vmatprep.subr.mxu0 0.0
    %1032 = vmatpush1.msra.mxu0 %v404
    %1033 = vmatprep.subr.mxu0 0.0
    %1034 = vmatpush1.msra.mxu0 %v407
    %1035 = vmatprep.subr.mxu0 0.0
    %1036 = vmatpush1.msra.mxu0 %v410
    %1037 = vmatprep.subr.mxu0 0.0
    %1038 = vmatpush1.msra.mxu0 %v413
    %1039 = vmatprep.subr.mxu0 0.0
    %1040 = vmatpush1.msra.mxu0 %v416
    %1041 = vmatprep.subr.mxu0 0.0
    %1042 = vmatpush1.msra.mxu0 %v419
    %1043 = vmatprep.subr.mxu0 0.0
    %1044 = vmatpush1.msra.mxu0 %v422
    %1045 = vmatprep.subr.mxu0 0.0
    %1046 = vmatpush1.msra.mxu0 %v425
    %1047 = vmatprep.subr.mxu0 0.0
    %1048 = vmatpush1.msra.mxu0 %v428
    %1049 = vmatprep.subr.mxu0 0.0
    %1050 = vmatpush1.msra.mxu0 0.0
    %1051 = vmatprep.subr.mxu0 0.0
    %1052 = vmatpush1.msra.mxu0 0.0
    %1053 = vmatprep.subr.mxu0 0.0
    %1054 = vmatpush1.msra.mxu0 0.0
    %1055 = vmatprep.subr.mxu0 0.0
    %1056 = vmatpush1.msra.mxu0 0.0
    %1057 = vmatprep.subr.mxu0 0.0
    %1058 = vmatpush1.msra.mxu0 0.0
    %1059 = vmatprep.subr.mxu0 0.0
    %1060 = vmatpush1.msra.mxu0 0.0
    %1061 = vmatprep.subr.mxu0 0.0
    %1062 = vmatpush1.msra.mxu0 0.0
    %1063 = vmatprep.subr.mxu0 0.0
    %1064 = vmatpush1.msra.mxu0 0.0
    %1065 = vmatprep.subr.mxu0 0.0
    %1066 = vmatpush1.msra.mxu0 0.0
    %1067 = vmatprep.subr.mxu0 0.0
    %1068 = vmatpush1.msra.mxu0 0.0
    %1069 = vmatprep.subr.mxu0 0.0
    %1070 = vmatpush1.msra.mxu0 0.0
    %1071 = vmatprep.subr.mxu0 0.0
    %1072 = vmatpush1.msra.mxu0 0.0
    %1073 = vmatprep.subr.mxu0 0.0
    %1074 = vmatpush1.msra.mxu0 0.0
    %1075 = vmatprep.subr.mxu0 0.0
    %1076 = vmatpush1.msra.mxu0 0.0
    %1077 = vmatprep.subr.mxu0 0.0
    %1078 = vmatpush1.msra.mxu0 0.0
    %1079 = vmatprep.subr.mxu0 0.0
    %1080 = vmatpush1.msra.mxu0 0.0
    %1081 = vmatprep.mubr.f32.mxu0 0.0
    %1082 = vmatmul.mubr.f32.gmra.mrb[0].mxu0 %v939
    %v1083 = vpop.f32.mrb[0].mxu0
    %v1084 = vadd.f32 0.0, %v1083
    %v1085 = vpop.f32.mrb[0].mxu0
    %1086 = vdwg.mxu0
    %v1087 = vadd.f32 %v943, %v1013
    %v1088 = vxor.u32 %v1087, 2147483648
    %v1089 = vmul.f32 %v1088, 1.442695
    %v1090 = vpow.pop %v1089
    %v1091 = vadd.f32 %v1090, 1.0
    %v1092 = vrcp.pop %v1091
    %v1093 = vmul.f32 1.0, %v1092
    %v1094 = vadd.f32 %v944, %v1015
    %v1095 = vxor.u32 %v1094, 2147483648
    %v1096 = vmul.f32 %v1095, 1.442695
    %v1097 = vpow.pop %v1096
    %v1098 = vadd.f32 %v1097, 1.0
    %v1099 = vrcp.pop %v1098
    %v1100 = vmul.f32 1.0, %v1099
    %v1101 = vadd.f32 %v1084, %v593
    %v1102 = vmul.f32 %v1093, %v1101
    %v1103 = vadd.f32 %v945, %v1102
    %v1104 = vtanh.pop %v1103
    %v1105 = vsub.f32 1.0, %v1100
    %v1106 = vmul.f32 %v1105, %v1104
    %v1107 = vmul.f32 %v1100, %v939
    %v1108 = vadd.f32 %v1106, %v1107
    %s1109 = scalar_lea.vmem [#allocation12], 24
    %1110 = vst [vmem:[%s1109] sm:$0xff] %v1108
    %s1111 = scalar_lea.vmem [#allocation2], 96
    %v1112 = vld [vmem:[%s1111] sm:$0xff]
    %v1113 = vld [vmem:[%s1111 + $0x8] sm:$0xff]
    %v1114 = vld [vmem:[%s1111 + $0x10] sm:$0xff]
    %1115 = vmatprep.subr.mxu0 %v382
    %1116 = vmatpush1.msra.mxu0 %v381
    %1117 = vmatprep.subr.mxu0 %v385
    %1118 = vmatpush1.msra.mxu0 %v384
    %1119 = vmatprep.subr.mxu0 %v388
    %1120 = vmatpush1.msra.mxu0 %v387
    %1121 = vmatprep.subr.mxu0 %v391
    %1122 = vmatpush1.msra.mxu0 %v390
    %1123 = vmatprep.subr.mxu0 %v394
    %1124 = vmatpush1.msra.mxu0 %v393
    %1125 = vmatprep.subr.mxu0 %v397
    %1126 = vmatpush1.msra.mxu0 %v396
    %1127 = vmatprep.subr.mxu0 %v400
    %1128 = vmatpush1.msra.mxu0 %v399
    %1129 = vmatprep.subr.mxu0 %v403
    %1130 = vmatpush1.msra.mxu0 %v402
    %1131 = vmatprep.subr.mxu0 %v406
    %1132 = vmatpush1.msra.mxu0 %v405
    %1133 = vmatprep.subr.mxu0 %v409
    %1134 = vmatpush1.msra.mxu0 %v408
    %1135 = vmatprep.subr.mxu0 %v412
    %1136 = vmatpush1.msra.mxu0 %v411
    %1137 = vmatprep.subr.mxu0 %v415
    %1138 = vmatpush1.msra.mxu0 %v414
    %1139 = vmatprep.subr.mxu0 %v418
    %1140 = vmatpush1.msra.mxu0 %v417
    %1141 = vmatprep.subr.mxu0 %v421
    %1142 = vmatpush1.msra.mxu0 %v420
    %1143 = vmatprep.subr.mxu0 %v424
    %1144 = vmatpush1.msra.mxu0 %v423
    %1145 = vmatprep.subr.mxu0 %v427
    %1146 = vmatpush1.msra.mxu0 %v426
    %1147 = vmatprep.subr.mxu0 0.0
    %1148 = vmatpush1.msra.mxu0 0.0
    %1149 = vmatprep.subr.mxu0 0.0
    %1150 = vmatpush1.msra.mxu0 0.0
    %1151 = vmatprep.subr.mxu0 0.0
    %1152 = vmatpush1.msra.mxu0 0.0
    %1153 = vmatprep.subr.mxu0 0.0
    %1154 = vmatpush1.msra.mxu0 0.0
    %1155 = vmatprep.subr.mxu0 0.0
    %1156 = vmatpush1.msra.mxu0 0.0
    %1157 = vmatprep.subr.mxu0 0.0
    %1158 = vmatpush1.msra.mxu0 0.0
    %1159 = vmatprep.subr.mxu0 0.0
    %1160 = vmatpush1.msra.mxu0 0.0
    %1161 = vmatprep.subr.mxu0 0.0
    %1162 = vmatpush1.msra.mxu0 0.0
    %1163 = vmatprep.subr.mxu0 0.0
    %1164 = vmatpush1.msra.mxu0 0.0
    %1165 = vmatprep.subr.mxu0 0.0
    %1166 = vmatpush1.msra.mxu0 0.0
    %1167 = vmatprep.subr.mxu0 0.0
    %1168 = vmatpush1.msra.mxu0 0.0
    %1169 = vmatprep.subr.mxu0 0.0
    %1170 = vmatpush1.msra.mxu0 0.0
    %1171 = vmatprep.subr.mxu0 0.0
    %1172 = vmatpush1.msra.mxu0 0.0
    %1173 = vmatprep.subr.mxu0 0.0
    %1174 = vmatpush1.msra.mxu0 0.0
    %1175 = vmatprep.subr.mxu0 0.0
    %1176 = vmatpush1.msra.mxu0 0.0
    %1177 = vmatprep.subr.mxu0 0.0
    %1178 = vmatpush1.msra.mxu0 0.0
    %1179 = vmatprep.mubr.f32.mxu0 0.0
    %1180 = vmatmul.mubr.f32.gmra.mrb[0].mxu0 %v1108
    %v1181 = vpop.f32.mrb[0].mxu0
    %v1182 = vadd.f32 0.0, %v1181
    %v1183 = vpop.f32.mrb[0].mxu0
    %v1184 = vadd.f32 0.0, %v1183
    %1185 = vdwg.mxu0
    %1186 = vmatprep.subr.mxu0 0.0
    %1187 = vmatpush1.msra.mxu0 %v383
    %1188 = vmatprep.subr.mxu0 0.0
    %1189 = vmatpush1.msra.mxu0 %v386
    %1190 = vmatprep.subr.mxu0 0.0
    %1191 = vmatpush1.msra.mxu0 %v389
    %1192 = vmatprep.subr.mxu0 0.0
    %1193 = vmatpush1.msra.mxu0 %v392
    %1194 = vmatprep.subr.mxu0 0.0
    %1195 = vmatpush1.msra.mxu0 %v395
    %1196 = vmatprep.subr.mxu0 0.0
    %1197 = vmatpush1.msra.mxu0 %v398
    %1198 = vmatprep.subr.mxu0 0.0
    %1199 = vmatpush1.msra.mxu0 %v401
    %1200 = vmatprep.subr.mxu0 0.0
    %1201 = vmatpush1.msra.mxu0 %v404
    %1202 = vmatprep.subr.mxu0 0.0
    %1203 = vmatpush1.msra.mxu0 %v407
    %1204 = vmatprep.subr.mxu0 0.0
    %1205 = vmatpush1.msra.mxu0 %v410
    %1206 = vmatprep.subr.mxu0 0.0
    %1207 = vmatpush1.msra.mxu0 %v413
    %1208 = vmatprep.subr.mxu0 0.0
    %1209 = vmatpush1.msra.mxu0 %v416
    %1210 = vmatprep.subr.mxu0 0.0
    %1211 = vmatpush1.msra.mxu0 %v419
    %1212 = vmatprep.subr.mxu0 0.0
    %1213 = vmatpush1.msra.mxu0 %v422
    %1214 = vmatprep.subr.mxu0 0.0
    %1215 = vmatpush1.msra.mxu0 %v425
    %1216 = vmatprep.subr.mxu0 0.0
    %1217 = vmatpush1.msra.mxu0 %v428
    %1218 = vmatprep.subr.mxu0 0.0
    %1219 = vmatpush1.msra.mxu0 0.0
    %1220 = vmatprep.subr.mxu0 0.0
    %1221 = vmatpush1.msra.mxu0 0.0
    %1222 = vmatprep.subr.mxu0 0.0
    %1223 = vmatpush1.msra.mxu0 0.0
    %1224 = vmatprep.subr.mxu0 0.0
    %1225 = vmatpush1.msra.mxu0 0.0
    %1226 = vmatprep.subr.mxu0 0.0
    %1227 = vmatpush1.msra.mxu0 0.0
    %1228 = vmatprep.subr.mxu0 0.0
    %1229 = vmatpush1.msra.mxu0 0.0
    %1230 = vmatprep.subr.mxu0 0.0
    %1231 = vmatpush1.msra.mxu0 0.0
    %1232 = vmatprep.subr.mxu0 0.0
    %1233 = vmatpush1.msra.mxu0 0.0
    %1234 = vmatprep.subr.mxu0 0.0
    %1235 = vmatpush1.msra.mxu0 0.0
    %1236 = vmatprep.subr.mxu0 0.0
    %1237 = vmatpush1.msra.mxu0 0.0
    %1238 = vmatprep.subr.mxu0 0.0
    %1239 = vmatpush1.msra.mxu0 0.0
    %1240 = vmatprep.subr.mxu0 0.0
    %1241 = vmatpush1.msra.mxu0 0.0
    %1242 = vmatprep.subr.mxu0 0.0
    %1243 = vmatpush1.msra.mxu0 0.0
    %1244 = vmatprep.subr.mxu0 0.0
    %1245 = vmatpush1.msra.mxu0 0.0
    %1246 = vmatprep.subr.mxu0 0.0
    %1247 = vmatpush1.msra.mxu0 0.0
    %1248 = vmatprep.subr.mxu0 0.0
    %1249 = vmatpush1.msra.mxu0 0.0
    %1250 = vmatprep.mubr.f32.mxu0 0.0
    %1251 = vmatmul.mubr.f32.gmra.mrb[0].mxu0 %v1108
    %v1252 = vpop.f32.mrb[0].mxu0
    %v1253 = vadd.f32 0.0, %v1252
    %v1254 = vpop.f32.mrb[0].mxu0
    %1255 = vdwg.mxu0
    %v1256 = vadd.f32 %v1112, %v1182
    %v1257 = vxor.u32 %v1256, 2147483648
    %v1258 = vmul.f32 %v1257, 1.442695
    %v1259 = vpow.pop %v1258
    %v1260 = vadd.f32 %v1259, 1.0
    %v1261 = vrcp.pop %v1260
    %v1262 = vmul.f32 1.0, %v1261
    %v1263 = vadd.f32 %v1113, %v1184
    %v1264 = vxor.u32 %v1263, 2147483648
    %v1265 = vmul.f32 %v1264, 1.442695
    %v1266 = vpow.pop %v1265
    %v1267 = vadd.f32 %v1266, 1.0
    %v1268 = vrcp.pop %v1267
    %v1269 = vmul.f32 1.0, %v1268
    %v1270 = vadd.f32 %v1253, %v593
    %v1271 = vmul.f32 %v1262, %v1270
    %v1272 = vadd.f32 %v1114, %v1271
    %v1273 = vtanh.pop %v1272
    %v1274 = vsub.f32 1.0, %v1269
    %v1275 = vmul.f32 %v1274, %v1273
    %v1276 = vmul.f32 %v1269, %v1108
    %v1277 = vadd.f32 %v1275, %v1276
    %s1278 = scalar_lea.vmem [#allocation12], 32
    %1279 = vst [vmem:[%s1278] sm:$0xff] %v1277
    %s1280 = scalar_lea.vmem [#allocation2], 120
    %v1281 = vld [vmem:[%s1280] sm:$0xff]
    %v1282 = vld [vmem:[%s1280 + $0x8] sm:$0xff]
    %v1283 = vld [vmem:[%s1280 + $0x10] sm:$0xff]
    %1284 = vmatprep.subr.mxu0 %v382
    %1285 = vmatpush1.msra.mxu0 %v381
    %1286 = vmatprep.subr.mxu0 %v385
    %1287 = vmatpush1.msra.mxu0 %v384
    %1288 = vmatprep.subr.mxu0 %v388
    %1289 = vmatpush1.msra.mxu0 %v387
    %1290 = vmatprep.subr.mxu0 %v391
    %1291 = vmatpush1.msra.mxu0 %v390
    %1292 = vmatprep.subr.mxu0 %v394
    %1293 = vmatpush1.msra.mxu0 %v393
    %1294 = vmatprep.subr.mxu0 %v397
    %1295 = vmatpush1.msra.mxu0 %v396
    %1296 = vmatprep.subr.mxu0 %v400
    %1297 = vmatpush1.msra.mxu0 %v399
    %1298 = vmatprep.subr.mxu0 %v403
    %1299 = vmatpush1.msra.mxu0 %v402
    %1300 = vmatprep.subr.mxu0 %v406
    %1301 = vmatpush1.msra.mxu0 %v405
    %1302 = vmatprep.subr.mxu0 %v409
    %1303 = vmatpush1.msra.mxu0 %v408
    %1304 = vmatprep.subr.mxu0 %v412
    %1305 = vmatpush1.msra.mxu0 %v411
    %1306 = vmatprep.subr.mxu0 %v415
    %1307 = vmatpush1.msra.mxu0 %v414
    %1308 = vmatprep.subr.mxu0 %v418
    %1309 = vmatpush1.msra.mxu0 %v417
    %1310 = vmatprep.subr.mxu0 %v421
    %1311 = vmatpush1.msra.mxu0 %v420
    %1312 = vmatprep.subr.mxu0 %v424
    %1313 = vmatpush1.msra.mxu0 %v423
    %1314 = vmatprep.subr.mxu0 %v427
    %1315 = vmatpush1.msra.mxu0 %v426
    %1316 = vmatprep.subr.mxu0 0.0
    %1317 = vmatpush1.msra.mxu0 0.0
    %1318 = vmatprep.subr.mxu0 0.0
    %1319 = vmatpush1.msra.mxu0 0.0
    %1320 = vmatprep.subr.mxu0 0.0
    %1321 = vmatpush1.msra.mxu0 0.0
    %1322 = vmatprep.subr.mxu0 0.0
    %1323 = vmatpush1.msra.mxu0 0.0
    %1324 = vmatprep.subr.mxu0 0.0
    %1325 = vmatpush1.msra.mxu0 0.0
    %1326 = vmatprep.subr.mxu0 0.0
    %1327 = vmatpush1.msra.mxu0 0.0
    %1328 = vmatprep.subr.mxu0 0.0
    %1329 = vmatpush1.msra.mxu0 0.0
    %1330 = vmatprep.subr.mxu0 0.0
    %1331 = vmatpush1.msra.mxu0 0.0
    %1332 = vmatprep.subr.mxu0 0.0
    %1333 = vmatpush1.msra.mxu0 0.0
    %1334 = vmatprep.subr.mxu0 0.0
    %1335 = vmatpush1.msra.mxu0 0.0
    %1336 = vmatprep.subr.mxu0 0.0
    %1337 = vmatpush1.msra.mxu0 0.0
    %1338 = vmatprep.subr.mxu0 0.0
    %1339 = vmatpush1.msra.mxu0 0.0
    %1340 = vmatprep.subr.mxu0 0.0
    %1341 = vmatpush1.msra.mxu0 0.0
    %1342 = vmatprep.subr.mxu0 0.0
    %1343 = vmatpush1.msra.mxu0 0.0
    %1344 = vmatprep.subr.mxu0 0.0
    %1345 = vmatpush1.msra.mxu0 0.0
    %1346 = vmatprep.subr.mxu0 0.0
    %1347 = vmatpush1.msra.mxu0 0.0
    %1348 = vmatprep.mubr.f32.mxu0 0.0
    %1349 = vmatmul.mubr.f32.gmra.mrb[0].mxu0 %v1277
    %v1350 = vpop.f32.mrb[0].mxu0
    %v1351 = vadd.f32 0.0, %v1350
    %v1352 = vpop.f32.mrb[0].mxu0
    %v1353 = vadd.f32 0.0, %v1352
    %1354 = vdwg.mxu0
    %1355 = vmatprep.subr.mxu0 0.0
    %1356 = vmatpush1.msra.mxu0 %v383
    %1357 = vmatprep.subr.mxu0 0.0
    %1358 = vmatpush1.msra.mxu0 %v386
    %1359 = vmatprep.subr.mxu0 0.0
    %1360 = vmatpush1.msra.mxu0 %v389
    %1361 = vmatprep.subr.mxu0 0.0
    %1362 = vmatpush1.msra.mxu0 %v392
    %1363 = vmatprep.subr.mxu0 0.0
    %1364 = vmatpush1.msra.mxu0 %v395
    %1365 = vmatprep.subr.mxu0 0.0
    %1366 = vmatpush1.msra.mxu0 %v398
    %1367 = vmatprep.subr.mxu0 0.0
    %1368 = vmatpush1.msra.mxu0 %v401
    %1369 = vmatprep.subr.mxu0 0.0
    %1370 = vmatpush1.msra.mxu0 %v404
    %1371 = vmatprep.subr.mxu0 0.0
    %1372 = vmatpush1.msra.mxu0 %v407
    %1373 = vmatprep.subr.mxu0 0.0
    %1374 = vmatpush1.msra.mxu0 %v410
    %1375 = vmatprep.subr.mxu0 0.0
    %1376 = vmatpush1.msra.mxu0 %v413
    %1377 = vmatprep.subr.mxu0 0.0
    %1378 = vmatpush1.msra.mxu0 %v416
    %1379 = vmatprep.subr.mxu0 0.0
    %1380 = vmatpush1.msra.mxu0 %v419
    %1381 = vmatprep.subr.mxu0 0.0
    %1382 = vmatpush1.msra.mxu0 %v422
    %1383 = vmatprep.subr.mxu0 0.0
    %1384 = vmatpush1.msra.mxu0 %v425
    %1385 = vmatprep.subr.mxu0 0.0
    %1386 = vmatpush1.msra.mxu0 %v428
    %1387 = vmatprep.subr.mxu0 0.0
    %1388 = vmatpush1.msra.mxu0 0.0
    %1389 = vmatprep.subr.mxu0 0.0
    %1390 = vmatpush1.msra.mxu0 0.0
    %1391 = vmatprep.subr.mxu0 0.0
    %1392 = vmatpush1.msra.mxu0 0.0
    %1393 = vmatprep.subr.mxu0 0.0
    %1394 = vmatpush1.msra.mxu0 0.0
    %1395 = vmatprep.subr.mxu0 0.0
    %1396 = vmatpush1.msra.mxu0 0.0
    %1397 = vmatprep.subr.mxu0 0.0
    %1398 = vmatpush1.msra.mxu0 0.0
    %1399 = vmatprep.subr.mxu0 0.0
    %1400 = vmatpush1.msra.mxu0 0.0
    %1401 = vmatprep.subr.mxu0 0.0
    %1402 = vmatpush1.msra.mxu0 0.0
    %1403 = vmatprep.subr.mxu0 0.0
    %1404 = vmatpush1.msra.mxu0 0.0
    %1405 = vmatprep.subr.mxu0 0.0
    %1406 = vmatpush1.msra.mxu0 0.0
    %1407 = vmatprep.subr.mxu0 0.0
    %1408 = vmatpush1.msra.mxu0 0.0
    %1409 = vmatprep.subr.mxu0 0.0
    %1410 = vmatpush1.msra.mxu0 0.0
    %1411 = vmatprep.subr.mxu0 0.0
    %1412 = vmatpush1.msra.mxu0 0.0
    %1413 = vmatprep.subr.mxu0 0.0
    %1414 = vmatpush1.msra.mxu0 0.0
    %1415 = vmatprep.subr.mxu0 0.0
    %1416 = vmatpush1.msra.mxu0 0.0
    %1417 = vmatprep.subr.mxu0 0.0
    %1418 = vmatpush1.msra.mxu0 0.0
    %1419 = vmatprep.mubr.f32.mxu0 0.0
    %1420 = vmatmul.mubr.f32.gmra.mrb[0].mxu0 %v1277
    %v1421 = vpop.f32.mrb[0].mxu0
    %v1422 = vadd.f32 0.0, %v1421
    %v1423 = vpop.f32.mrb[0].mxu0
    %1424 = vdwg.mxu0
    %v1425 = vadd.f32 %v1281, %v1351
    %v1426 = vxor.u32 %v1425, 2147483648
    %v1427 = vmul.f32 %v1426, 1.442695
    %v1428 = vpow.pop %v1427
    %v1429 = vadd.f32 %v1428, 1.0
    %v1430 = vrcp.pop %v1429
    %v1431 = vmul.f32 1.0, %v1430
    %v1432 = vadd.f32 %v1282, %v1353
    %v1433 = vxor.u32 %v1432, 2147483648
    %v1434 = vmul.f32 %v1433, 1.442695
    %v1435 = vpow.pop %v1434
    %v1436 = vadd.f32 %v1435, 1.0
    %v1437 = vrcp.pop %v1436
    %v1438 = vmul.f32 1.0, %v1437
    %v1439 = vadd.f32 %v1422, %v593
    %v1440 = vmul.f32 %v1431, %v1439
    %v1441 = vadd.f32 %v1283, %v1440
    %v1442 = vtanh.pop %v1441
    %v1443 = vsub.f32 1.0, %v1438
    %v1444 = vmul.f32 %v1443, %v1442
    %v1445 = vmul.f32 %v1438, %v1277
    %v1446 = vadd.f32 %v1444, %v1445
    %s1447 = scalar_lea.vmem [#allocation12], 40
    %1448 = vst [vmem:[%s1447] sm:$0xff] %v1446
    %s1449 = scalar_lea.vmem [#allocation2], 144
    %v1450 = vld [vmem:[%s1449] sm:$0xff]
    %v1451 = vld [vmem:[%s1449 + $0x8] sm:$0xff]
    %v1452 = vld [vmem:[%s1449 + $0x10] sm:$0xff]
    %1453 = vmatprep.subr.mxu0 %v382
    %1454 = vmatpush1.msra.mxu0 %v381
    %1455 = vmatprep.subr.mxu0 %v385
    %1456 = vmatpush1.msra.mxu0 %v384
    %1457 = vmatprep.subr.mxu0 %v388
    %1458 = vmatpush1.msra.mxu0 %v387
    %1459 = vmatprep.subr.mxu0 %v391
    %1460 = vmatpush1.msra.mxu0 %v390
    %1461 = vmatprep.subr.mxu0 %v394
    %1462 = vmatpush1.msra.mxu0 %v393
    %1463 = vmatprep.subr.mxu0 %v397
    %1464 = vmatpush1.msra.mxu0 %v396
    %1465 = vmatprep.subr.mxu0 %v400
    %1466 = vmatpush1.msra.mxu0 %v399
    %1467 = vmatprep.subr.mxu0 %v403
    %1468 = vmatpush1.msra.mxu0 %v402
    %1469 = vmatprep.subr.mxu0 %v406
    %1470 = vmatpush1.msra.mxu0 %v405
    %1471 = vmatprep.subr.mxu0 %v409
    %1472 = vmatpush1.msra.mxu0 %v408
    %1473 = vmatprep.subr.mxu0 %v412
    %1474 = vmatpush1.msra.mxu0 %v411
    %1475 = vmatprep.subr.mxu0 %v415
    %1476 = vmatpush1.msra.mxu0 %v414
    %1477 = vmatprep.subr.mxu0 %v418
    %1478 = vmatpush1.msra.mxu0 %v417
    %1479 = vmatprep.subr.mxu0 %v421
    %1480 = vmatpush1.msra.mxu0 %v420
    %1481 = vmatprep.subr.mxu0 %v424
    %1482 = vmatpush1.msra.mxu0 %v423
    %1483 = vmatprep.subr.mxu0 %v427
    %1484 = vmatpush1.msra.mxu0 %v426
    %1485 = vmatprep.subr.mxu0 0.0
    %1486 = vmatpush1.msra.mxu0 0.0
    %1487 = vmatprep.subr.mxu0 0.0
    %1488 = vmatpush1.msra.mxu0 0.0
    %1489 = vmatprep.subr.mxu0 0.0
    %1490 = vmatpush1.msra.mxu0 0.0
    %1491 = vmatprep.subr.mxu0 0.0
    %1492 = vmatpush1.msra.mxu0 0.0
    %1493 = vmatprep.subr.mxu0 0.0
    %1494 = vmatpush1.msra.mxu0 0.0
    %1495 = vmatprep.subr.mxu0 0.0
    %1496 = vmatpush1.msra.mxu0 0.0
    %1497 = vmatprep.subr.mxu0 0.0
    %1498 = vmatpush1.msra.mxu0 0.0
    %1499 = vmatprep.subr.mxu0 0.0
    %1500 = vmatpush1.msra.mxu0 0.0
    %1501 = vmatprep.subr.mxu0 0.0
    %1502 = vmatpush1.msra.mxu0 0.0
    %1503 = vmatprep.subr.mxu0 0.0
    %1504 = vmatpush1.msra.mxu0 0.0
    %1505 = vmatprep.subr.mxu0 0.0
    %1506 = vmatpush1.msra.mxu0 0.0
    %1507 = vmatprep.subr.mxu0 0.0
    %1508 = vmatpush1.msra.mxu0 0.0
    %1509 = vmatprep.subr.mxu0 0.0
    %1510 = vmatpush1.msra.mxu0 0.0
    %1511 = vmatprep.subr.mxu0 0.0
    %1512 = vmatpush1.msra.mxu0 0.0
    %1513 = vmatprep.subr.mxu0 0.0
    %1514 = vmatpush1.msra.mxu0 0.0
    %1515 = vmatprep.subr.mxu0 0.0
    %1516 = vmatpush1.msra.mxu0 0.0
    %1517 = vmatprep.mubr.f32.mxu0 0.0
    %1518 = vmatmul.mubr.f32.gmra.mrb[0].mxu0 %v1446
    %v1519 = vpop.f32.mrb[0].mxu0
    %v1520 = vadd.f32 0.0, %v1519
    %v1521 = vpop.f32.mrb[0].mxu0
    %v1522 = vadd.f32 0.0, %v1521
    %1523 = vdwg.mxu0
    %1524 = vmatprep.subr.mxu0 0.0
    %1525 = vmatpush1.msra.mxu0 %v383
    %1526 = vmatprep.subr.mxu0 0.0
    %1527 = vmatpush1.msra.mxu0 %v386
    %1528 = vmatprep.subr.mxu0 0.0
    %1529 = vmatpush1.msra.mxu0 %v389
    %1530 = vmatprep.subr.mxu0 0.0
    %1531 = vmatpush1.msra.mxu0 %v392
    %1532 = vmatprep.subr.mxu0 0.0
    %1533 = vmatpush1.msra.mxu0 %v395
    %1534 = vmatprep.subr.mxu0 0.0
    %1535 = vmatpush1.msra.mxu0 %v398
    %1536 = vmatprep.subr.mxu0 0.0
    %1537 = vmatpush1.msra.mxu0 %v401
    %1538 = vmatprep.subr.mxu0 0.0
    %1539 = vmatpush1.msra.mxu0 %v404
    %1540 = vmatprep.subr.mxu0 0.0
    %1541 = vmatpush1.msra.mxu0 %v407
    %1542 = vmatprep.subr.mxu0 0.0
    %1543 = vmatpush1.msra.mxu0 %v410
    %1544 = vmatprep.subr.mxu0 0.0
    %1545 = vmatpush1.msra.mxu0 %v413
    %1546 = vmatprep.subr.mxu0 0.0
    %1547 = vmatpush1.msra.mxu0 %v416
    %1548 = vmatprep.subr.mxu0 0.0
    %1549 = vmatpush1.msra.mxu0 %v419
    %1550 = vmatprep.subr.mxu0 0.0
    %1551 = vmatpush1.msra.mxu0 %v422
    %1552 = vmatprep.subr.mxu0 0.0
    %1553 = vmatpush1.msra.mxu0 %v425
    %1554 = vmatprep.subr.mxu0 0.0
    %1555 = vmatpush1.msra.mxu0 %v428
    %1556 = vmatprep.subr.mxu0 0.0
    %1557 = vmatpush1.msra.mxu0 0.0
    %1558 = vmatprep.subr.mxu0 0.0
    %1559 = vmatpush1.msra.mxu0 0.0
    %1560 = vmatprep.subr.mxu0 0.0
    %1561 = vmatpush1.msra.mxu0 0.0
    %1562 = vmatprep.subr.mxu0 0.0
    %1563 = vmatpush1.msra.mxu0 0.0
    %1564 = vmatprep.subr.mxu0 0.0
    %1565 = vmatpush1.msra.mxu0 0.0
    %1566 = vmatprep.subr.mxu0 0.0
    %1567 = vmatpush1.msra.mxu0 0.0
    %1568 = vmatprep.subr.mxu0 0.0
    %1569 = vmatpush1.msra.mxu0 0.0
    %1570 = vmatprep.subr.mxu0 0.0
    %1571 = vmatpush1.msra.mxu0 0.0
    %1572 = vmatprep.subr.mxu0 0.0
    %1573 = vmatpush1.msra.mxu0 0.0
    %1574 = vmatprep.subr.mxu0 0.0
    %1575 = vmatpush1.msra.mxu0 0.0
    %1576 = vmatprep.subr.mxu0 0.0
    %1577 = vmatpush1.msra.mxu0 0.0
    %1578 = vmatprep.subr.mxu0 0.0
    %1579 = vmatpush1.msra.mxu0 0.0
    %1580 = vmatprep.subr.mxu0 0.0
    %1581 = vmatpush1.msra.mxu0 0.0
    %1582 = vmatprep.subr.mxu0 0.0
    %1583 = vmatpush1.msra.mxu0 0.0
    %1584 = vmatprep.subr.mxu0 0.0
    %1585 = vmatpush1.msra.mxu0 0.0
    %1586 = vmatprep.subr.mxu0 0.0
    %1587 = vmatpush1.msra.mxu0 0.0
    %1588 = vmatprep.mubr.f32.mxu0 0.0
    %1589 = vmatmul.mubr.f32.gmra.mrb[0].mxu0 %v1446
    %v1590 = vpop.f32.mrb[0].mxu0
    %v1591 = vadd.f32 0.0, %v1590
    %v1592 = vpop.f32.mrb[0].mxu0
    %1593 = vdwg.mxu0
    %v1594 = vadd.f32 %v1450, %v1520
    %v1595 = vxor.u32 %v1594, 2147483648
    %v1596 = vmul.f32 %v1595, 1.442695
    %v1597 = vpow.pop %v1596
    %v1598 = vadd.f32 %v1597, 1.0
    %v1599 = vrcp.pop %v1598
    %v1600 = vmul.f32 1.0, %v1599
    %v1601 = vadd.f32 %v1451, %v1522
    %v1602 = vxor.u32 %v1601, 2147483648
    %v1603 = vmul.f32 %v1602, 1.442695
    %v1604 = vpow.pop %v1603
    %v1605 = vadd.f32 %v1604, 1.0
    %v1606 = vrcp.pop %v1605
    %v1607 = vmul.f32 1.0, %v1606
    %v1608 = vadd.f32 %v1591, %v593
    %v1609 = vmul.f32 %v1600, %v1608
    %v1610 = vadd.f32 %v1452, %v1609
    %v1611 = vtanh.pop %v1610
    %v1612 = vsub.f32 1.0, %v1607
    %v1613 = vmul.f32 %v1612, %v1611
    %v1614 = vmul.f32 %v1607, %v1446
    %v1615 = vadd.f32 %v1613, %v1614
    %s1616 = scalar_lea.vmem [#allocation12], 48
    %1617 = vst [vmem:[%s1616] sm:$0xff] %v1615
    %s1618 = scalar_lea.vmem [#allocation2], 168
    %v1619 = vld [vmem:[%s1618] sm:$0xff]
    %v1620 = vld [vmem:[%s1618 + $0x8] sm:$0xff]
    %v1621 = vld [vmem:[%s1618 + $0x10] sm:$0xff]
    %1622 = vmatprep.subr.mxu0 %v382
    %1623 = vmatpush1.msra.mxu0 %v381
    %1624 = vmatprep.subr.mxu0 %v385
    %1625 = vmatpush1.msra.mxu0 %v384
    %1626 = vmatprep.subr.mxu0 %v388
    %1627 = vmatpush1.msra.mxu0 %v387
    %1628 = vmatprep.subr.mxu0 %v391
    %1629 = vmatpush1.msra.mxu0 %v390
    %1630 = vmatprep.subr.mxu0 %v394
    %1631 = vmatpush1.msra.mxu0 %v393
    %1632 = vmatprep.subr.mxu0 %v397
    %1633 = vmatpush1.msra.mxu0 %v396
    %1634 = vmatprep.subr.mxu0 %v400
    %1635 = vmatpush1.msra.mxu0 %v399
    %1636 = vmatprep.subr.mxu0 %v403
    %1637 = vmatpush1.msra.mxu0 %v402
    %1638 = vmatprep.subr.mxu0 %v406
    %1639 = vmatpush1.msra.mxu0 %v405
    %1640 = vmatprep.subr.mxu0 %v409
    %1641 = vmatpush1.msra.mxu0 %v408
    %1642 = vmatprep.subr.mxu0 %v412
    %1643 = vmatpush1.msra.mxu0 %v411
    %1644 = vmatprep.subr.mxu0 %v415
    %1645 = vmatpush1.msra.mxu0 %v414
    %1646 = vmatprep.subr.mxu0 %v418
    %1647 = vmatpush1.msra.mxu0 %v417
    %1648 = vmatprep.subr.mxu0 %v421
    %1649 = vmatpush1.msra.mxu0 %v420
    %1650 = vmatprep.subr.mxu0 %v424
    %1651 = vmatpush1.msra.mxu0 %v423
    %1652 = vmatprep.subr.mxu0 %v427
    %1653 = vmatpush1.msra.mxu0 %v426
    %1654 = vmatprep.subr.mxu0 0.0
    %1655 = vmatpush1.msra.mxu0 0.0
    %1656 = vmatprep.subr.mxu0 0.0
    %1657 = vmatpush1.msra.mxu0 0.0
    %1658 = vmatprep.subr.mxu0 0.0
    %1659 = vmatpush1.msra.mxu0 0.0
    %1660 = vmatprep.subr.mxu0 0.0
    %1661 = vmatpush1.msra.mxu0 0.0
    %1662 = vmatprep.subr.mxu0 0.0
    %1663 = vmatpush1.msra.mxu0 0.0
    %1664 = vmatprep.subr.mxu0 0.0
    %1665 = vmatpush1.msra.mxu0 0.0
    %1666 = vmatprep.subr.mxu0 0.0
    %1667 = vmatpush1.msra.mxu0 0.0
    %1668 = vmatprep.subr.mxu0 0.0
    %1669 = vmatpush1.msra.mxu0 0.0
    %1670 = vmatprep.subr.mxu0 0.0
    %1671 = vmatpush1.msra.mxu0 0.0
    %1672 = vmatprep.subr.mxu0 0.0
    %1673 = vmatpush1.msra.mxu0 0.0
    %1674 = vmatprep.subr.mxu0 0.0
    %1675 = vmatpush1.msra.mxu0 0.0
    %1676 = vmatprep.subr.mxu0 0.0
    %1677 = vmatpush1.msra.mxu0 0.0
    %1678 = vmatprep.subr.mxu0 0.0
    %1679 = vmatpush1.msra.mxu0 0.0
    %1680 = vmatprep.subr.mxu0 0.0
    %1681 = vmatpush1.msra.mxu0 0.0
    %1682 = vmatprep.subr.mxu0 0.0
    %1683 = vmatpush1.msra.mxu0 0.0
    %1684 = vmatprep.subr.mxu0 0.0
    %1685 = vmatpush1.msra.mxu0 0.0
    %1686 = vmatprep.mubr.f32.mxu0 0.0
    %1687 = vmatmul.mubr.f32.gmra.mrb[0].mxu0 %v1615
    %v1688 = vpop.f32.mrb[0].mxu0
    %v1689 = vadd.f32 0.0, %v1688
    %v1690 = vpop.f32.mrb[0].mxu0
    %v1691 = vadd.f32 0.0, %v1690
    %1692 = vdwg.mxu0
    %1693 = vmatprep.subr.mxu0 0.0
    %1694 = vmatpush1.msra.mxu0 %v383
    %1695 = vmatprep.subr.mxu0 0.0
    %1696 = vmatpush1.msra.mxu0 %v386
    %1697 = vmatprep.subr.mxu0 0.0
    %1698 = vmatpush1.msra.mxu0 %v389
    %1699 = vmatprep.subr.mxu0 0.0
    %1700 = vmatpush1.msra.mxu0 %v392
    %1701 = vmatprep.subr.mxu0 0.0
    %1702 = vmatpush1.msra.mxu0 %v395
    %1703 = vmatprep.subr.mxu0 0.0
    %1704 = vmatpush1.msra.mxu0 %v398
    %1705 = vmatprep.subr.mxu0 0.0
    %1706 = vmatpush1.msra.mxu0 %v401
    %1707 = vmatprep.subr.mxu0 0.0
    %1708 = vmatpush1.msra.mxu0 %v404
    %1709 = vmatprep.subr.mxu0 0.0
    %1710 = vmatpush1.msra.mxu0 %v407
    %1711 = vmatprep.subr.mxu0 0.0
    %1712 = vmatpush1.msra.mxu0 %v410
    %1713 = vmatprep.subr.mxu0 0.0
    %1714 = vmatpush1.msra.mxu0 %v413
    %1715 = vmatprep.subr.mxu0 0.0
    %1716 = vmatpush1.msra.mxu0 %v416
    %1717 = vmatprep.subr.mxu0 0.0
    %1718 = vmatpush1.msra.mxu0 %v419
    %1719 = vmatprep.subr.mxu0 0.0
    %1720 = vmatpush1.msra.mxu0 %v422
    %1721 = vmatprep.subr.mxu0 0.0
    %1722 = vmatpush1.msra.mxu0 %v425
    %1723 = vmatprep.subr.mxu0 0.0
    %1724 = vmatpush1.msra.mxu0 %v428
    %1725 = vmatprep.subr.mxu0 0.0
    %1726 = vmatpush1.msra.mxu0 0.0
    %1727 = vmatprep.subr.mxu0 0.0
    %1728 = vmatpush1.msra.mxu0 0.0
    %1729 = vmatprep.subr.mxu0 0.0
    %1730 = vmatpush1.msra.mxu0 0.0
    %1731 = vmatprep.subr.mxu0 0.0
    %1732 = vmatpush1.msra.mxu0 0.0
    %1733 = vmatprep.subr.mxu0 0.0
    %1734 = vmatpush1.msra.mxu0 0.0
    %1735 = vmatprep.subr.mxu0 0.0
    %1736 = vmatpush1.msra.mxu0 0.0
    %1737 = vmatprep.subr.mxu0 0.0
    %1738 = vmatpush1.msra.mxu0 0.0
    %1739 = vmatprep.subr.mxu0 0.0
    %1740 = vmatpush1.msra.mxu0 0.0
    %1741 = vmatprep.subr.mxu0 0.0
    %1742 = vmatpush1.msra.mxu0 0.0
    %1743 = vmatprep.subr.mxu0 0.0
    %1744 = vmatpush1.msra.mxu0 0.0
    %1745 = vmatprep.subr.mxu0 0.0
    %1746 = vmatpush1.msra.mxu0 0.0
    %1747 = vmatprep.subr.mxu0 0.0
    %1748 = vmatpush1.msra.mxu0 0.0
    %1749 = vmatprep.subr.mxu0 0.0
    %1750 = vmatpush1.msra.mxu0 0.0
    %1751 = vmatprep.subr.mxu0 0.0
    %1752 = vmatpush1.msra.mxu0 0.0
    %1753 = vmatprep.subr.mxu0 0.0
    %1754 = vmatpush1.msra.mxu0 0.0
    %1755 = vmatprep.subr.mxu0 0.0
    %1756 = vmatpush1.msra.mxu0 0.0
    %1757 = vmatprep.mubr.f32.mxu0 0.0
    %1758 = vmatmul.mubr.f32.gmra.mrb[0].mxu0 %v1615
    %v1759 = vpop.f32.mrb[0].mxu0
    %v1760 = vadd.f32 0.0, %v1759
    %v1761 = vpop.f32.mrb[0].mxu0
    %1762 = vdwg.mxu0
    %v1763 = vadd.f32 %v1619, %v1689
    %v1764 = vxor.u32 %v1763, 2147483648
    %v1765 = vmul.f32 %v1764, 1.442695
    %v1766 = vpow.pop %v1765
    %v1767 = vadd.f32 %v1766, 1.0
    %v1768 = vrcp.pop %v1767
    %v1769 = vmul.f32 1.0, %v1768
    %v1770 = vadd.f32 %v1620, %v1691
    %v1771 = vxor.u32 %v1770, 2147483648
    %v1772 = vmul.f32 %v1771, 1.442695
    %v1773 = vpow.pop %v1772
    %v1774 = vadd.f32 %v1773, 1.0
    %v1775 = vrcp.pop %v1774
    %v1776 = vmul.f32 1.0, %v1775
    %v1777 = vadd.f32 %v1760, %v593
    %v1778 = vmul.f32 %v1769, %v1777
    %v1779 = vadd.f32 %v1621, %v1778
    %v1780 = vtanh.pop %v1779
    %v1781 = vsub.f32 1.0, %v1776
    %v1782 = vmul.f32 %v1781, %v1780
    %v1783 = vmul.f32 %v1776, %v1615
    %v1784 = vadd.f32 %v1782, %v1783
    %s1785 = scalar_lea.vmem [#allocation12], 56
    %1786 = vst [vmem:[%s1785] sm:$0xff] %v1784
    %1787 = vst [vmem:[#allocation3] sm:$0xff] %v1784
    // Predicated region
    $region46: #{tpu_custom_call.1} parent=1 // pred_check
      _
    $region47: #{tpu_custom_call.1} parent=1 // pred_check_branch
      %1789 = sbr.rel (0) target = $region49
    $region48: #{tpu_custom_call.1} parent=1 // pred_region
      %s1791 = ssub.s32 1024, 1024
      %1792 = vsyncadd [#allocation6], %s1791
      %s1793 = sshll.u32 [#allocation12], 4
      %s1794 = int_to_ptr.vmem [resolvable:$true] %s1793
      %1799 = dma.vmem_to_hbm [thread:$0]  %s1794, 1024, %s6, [#allocation6], 128, 128, 8
    $region49: #{tpu_custom_call.1} parent=1 // pred_fallthru
      _
    // Predicated region
    $region50: #{tpu_custom_call.1} parent=1 // pred_check
      _
    $region51: #{tpu_custom_call.1} parent=1 // pred_check_branch
      %1801 = sbr.rel (0) target = $region53
    $region52: #{tpu_custom_call.1} parent=1 // pred_region
      %1802 = dma.done [#allocation6], 1024
    $region53: #{tpu_custom_call.1} parent=1 // pred_fallthru
      _
    %1803 = vsyncpa [#allocation5], 1
    %1804 = vsyncpa [#allocation8], 1
    %1805 = vsyncpa [#allocation11], 1
    %1806 = vsyncpa [#allocation6], 1

</llo_original>
